<compile_context>
chip_gen: v6e
topology: v6e:2x2x1
jax: 0.10.0
libtpu: 0.0.40
codegen_flags: <defaults>
</compile_context>

<pallas_src>
import functools
import math

import jax
import jax.numpy as jnp
import numpy as np
from jax.experimental import pallas as pl
from jax.experimental.pallas import tpu as pltpu


def _attn_kernel(x_ref, mask_ref, wqkv_ref, bqkv_ref, out_ref, acc_ref, *,
                 num_heads, head_size, head_pad, c_pad):
    # x_ref:    [1, W, C_in]      channels on lanes
    # mask_ref: [1, 1, 1, W]      additive bias over keys
    # wqkv_ref: [C_in, 3*C_pad]   bf16 fused (q | k | v) weights, head dim padded
    # bqkv_ref: [1, 3*C_pad]      f32 fused biases
    # out_ref:  [1, W, C_pad]
    # acc_ref:  [W, C_pad]        f32 VMEM scratch (all heads' context)
    x = x_ref[0].astype(jnp.bfloat16)                                  # [W, C_in]

    # Fused q/k/v projection: one MXU matmul, f32 accumulation, one bias add.
    qkv = jnp.dot(x, wqkv_ref[...],
                  preferred_element_type=jnp.float32) + bqkv_ref[...]  # [W, 3*C_pad]

    mask = mask_ref[0, 0]                                              # [1, W] (keys)
    inv_sqrt_d = jnp.float32(1.0 / math.sqrt(head_size))

    for h in range(num_heads):
        lo = h * head_pad
        hi = lo + head_pad
        qh = qkv[:, lo:hi].astype(jnp.bfloat16)                        # [W, dp]
        kh = qkv[:, c_pad + lo:c_pad + hi].astype(jnp.bfloat16)        # [W, dp]
        vh = qkv[:, 2 * c_pad + lo:2 * c_pad + hi].astype(jnp.bfloat16)

        # scores[q, k] = (qh . kh) / sqrt(d) + mask[k]   (q @ k^T, no LHS transpose)
        s = jax.lax.dot_general(qh, kh, (((1,), (1,)), ((), ())),
                                preferred_element_type=jnp.float32)    # [W, W]
        s = s * inv_sqrt_d + mask

        # numerically-stable softmax over keys; EUP approx reciprocal for the denom
        s = s - jnp.max(s, axis=-1, keepdims=True)
        p = jnp.exp(s)
        p = p * pl.reciprocal(jnp.sum(p, axis=-1, keepdims=True), approx=True)
        # TODO(synk): attention-prob dropout skipped (module is evaluated in eval mode).

        # context = p @ v  -> already in [W, dp] output layout
        ctx = jnp.dot(p.astype(jnp.bfloat16), vh,
                      preferred_element_type=jnp.float32)              # [W, dp]
        acc_ref[:, lo:hi] = ctx

    # single lane-dense store per batch element
    out_ref[0] = acc_ref[...].astype(out_ref.dtype)


def squeezebert_self_attention(x, mask, wq, bq, wk, bk, wv, bv, *, num_heads):
    """x: [N, C, W] f32, mask: [N, 1, 1, W] f32, w*: [C, C], b*: [C, 1] -> [N, C, W]."""
    N, C, W = x.shape
    assert C % num_heads == 0
    d = C // num_heads
    d_pad = -(-d // 8) * 8                     # pad head size (11 -> 16; 16 -> 16)
    c_pad = num_heads * d_pad

    def pad_w(w):                              # [C_out, C_in] -> [C_in, c_pad] (transposed)
        w_t = w.T.reshape(C, num_heads, d)
        w_t = jnp.pad(w_t, ((0, 0), (0, 0), (0, d_pad - d)))
        return w_t.reshape(C, c_pad)

    def pad_b(b):                              # [C_out, 1] -> [1, c_pad]
        b_p = b[:, 0].reshape(num_heads, d)
        b_p = jnp.pad(b_p, ((0, 0), (0, d_pad - d)))
        return b_p.reshape(1, c_pad)

    # Fused, transposed, head-padded q|k|v weights (bf16) and biases (f32).
    w_qkv = jnp.concatenate([pad_w(wq), pad_w(wk), pad_w(wv)],
                            axis=1).astype(jnp.bfloat16)               # [C, 3*c_pad]
    b_qkv = jnp.concatenate([pad_b(bq), pad_b(bk), pad_b(bv)], axis=1)  # [1, 3*c_pad]

    x_t = jnp.transpose(x, (0, 2, 1))          # [N, W, C]  (channels on lanes)

    kernel = functools.partial(_attn_kernel, num_heads=num_heads,
                               head_size=d, head_pad=d_pad, c_pad=c_pad)

    out_pad = pl.pallas_call(
        kernel,
        out_shape=jax.ShapeDtypeStruct((N, W, c_pad), x.dtype),
        grid=(N,),
        in_specs=[
            pl.BlockSpec((1, W, C), lambda n: (n, 0, 0)),
            pl.BlockSpec((1, 1, 1, W), lambda n: (n, 0, 0, 0)),
            pl.BlockSpec((C, 3 * c_pad), lambda n: (0, 0)),
            pl.BlockSpec((1, 3 * c_pad), lambda n: (0, 0)),
        ],
        out_specs=pl.BlockSpec((1, W, c_pad), lambda n: (n, 0, 0)),
        scratch_shapes=[pltpu.VMEM((W, c_pad), jnp.float32)],
        compiler_params=pltpu.CompilerParams(
            dimension_semantics=("parallel",)),
    )(x_t, mask, w_qkv, b_qkv)

    # Drop head padding and return to SqueezeBERT's native [N, C, W] layout.
    out = out_pad.reshape(N, W, num_heads, d_pad)[:, :, :, :d].reshape(N, W, C)
    return jnp.transpose(out, (0, 2, 1))


def _reference(x, mask, wq, bq, wk, bk, wv, bv, num_heads):
    """Pure-JAX reference mirroring SqueezeBertSelfAttention (eval mode)."""
    N, C, W = x.shape
    d = C // num_heads
    q = jnp.einsum('oc,ncw->now', wq, x) + bq[None, :, :]
    k = jnp.einsum('oc,ncw->now', wk, x) + bk[None, :, :]
    v = jnp.einsum('oc,ncw->now', wv, x) + bv[None, :, :]
    qh = q.reshape(N, num_heads, d, W).transpose(0, 1, 3, 2)   # [N,H,W,d]
    kh = k.reshape(N, num_heads, d, W)                          # [N,H,d,W]
    vh = v.reshape(N, num_heads, d, W).transpose(0, 1, 3, 2)   # [N,H,W,d]
    scores = jnp.einsum('nhqd,nhdk->nhqk', qh, kh) / math.sqrt(d)
    scores = scores + mask                                      # [N,1,1,W] broadcast
    probs = jax.nn.softmax(scores, axis=-1)
    ctx = jnp.einsum('nhqk,nhkd->nhqd', probs, vh)              # [N,H,W,d]
    ctx = ctx.transpose(0, 1, 3, 2).reshape(N, C, W)            # [N,C,W]
    return ctx


def _init_params(key, cin):
    """Deterministic Conv1d(cin, cin, 1) q/k/v parameters. w: [C, C], b: [C, 1]."""
    keys = jax.random.split(key, 6)
    bound = 1.0 / math.sqrt(cin)
    wq = jax.random.uniform(keys[0], (cin, cin), jnp.float32, -bound, bound)
    bq = jax.random.uniform(keys[1], (cin, 1), jnp.float32, -bound, bound)
    wk = jax.random.uniform(keys[2], (cin, cin), jnp.float32, -bound, bound)
    bk = jax.random.uniform(keys[3], (cin, 1), jnp.float32, -bound, bound)
    wv = jax.random.uniform(keys[4], (cin, cin), jnp.float32, -bound, bound)
    bv = jax.random.uniform(keys[5], (cin, 1), jnp.float32, -bound, bound)
    return wq, bq, wk, bk, wv, bv


if __name__ == "__main__":
    root = jax.random.PRNGKey(0)
    k_x, k_y, k_m0, k_m1, k_p0, k_p1 = jax.random.split(root, 6)

    # attn0: hidden=192, heads=12 (head_size=16); attn1: hidden=66, heads=6 (head_size=11)
    N, W = 2, 16
    x = jax.random.normal(k_x, (N, 192, W), jnp.float32)
    y = jax.random.normal(k_y, (N, 66, W), jnp.float32)
    mask0 = jax.random.normal(k_m0, (N, 1, 1, W), jnp.float32)
    mask1 = jax.random.normal(k_m1, (N, 1, 1, W), jnp.float32)

    params0 = _init_params(k_p0, 192)
    params1 = _init_params(k_p1, 66)

    out0 = squeezebert_self_attention(x, mask0, *params0, num_heads=12)
    out1 = squeezebert_self_attention(y, mask1, *params1, num_heads=6)
    out0, out1 = jax.block_until_ready((out0, out1))

    ref0 = _reference(x, mask0, *params0, num_heads=12)
    ref1 = _reference(y, mask1, *params1, num_heads=6)
    np.testing.assert_allclose(np.asarray(out0), np.asarray(ref0), rtol=2e-2, atol=2e-2)
    np.testing.assert_allclose(np.asarray(out1), np.asarray(ref1), rtol=2e-2, atol=2e-2)

    print("KERNEL_OK")
</pallas_src>

<mosaic_0001>
module attributes {stable_mosaic.version = 11 : i64} {
  func.func @_attn_kernel(%arg0: i32, %arg1: memref<1x16x192xf32, #tpu.memory_space<vmem>>, %arg2: memref<1x1x1x16xf32, #tpu.memory_space<vmem>>, %arg3: memref<192x576xbf16, #tpu.memory_space<vmem>>, %arg4: memref<1x576xf32, #tpu.memory_space<vmem>>, %arg5: memref<1x16x192xf32, #tpu.memory_space<vmem>>, %arg6: memref<16x192xf32, #tpu.memory_space<vmem>>) attributes {dimension_semantics = [#tpu.dimension_semantics<parallel>], iteration_bounds = array<i64: 2>, scalar_prefetch = 0 : i64, scratch_operands = 1 : i64, tpu.core_type = #tpu.core_type<tc>, window_params = [{transform_indices = @transform_0, window_bounds = array<i64: 1, 16, 192>}, {transform_indices = @transform_1, window_bounds = array<i64: 1, 1, 1, 16>}, {pipeline_mode = #tpu.pipeline_mode<synchronous>, transform_indices = @transform_2, window_bounds = array<i64: 192, 576>}, {pipeline_mode = #tpu.pipeline_mode<synchronous>, transform_indices = @transform_3, window_bounds = array<i64: 1, 576>}, {transform_indices = @transform_4, window_bounds = array<i64: 1, 16, 192>}]} {
    %c0 = arith.constant 0 : index
    %c0_0 = arith.constant 0 : index
    %c0_1 = arith.constant 0 : index
    %0 = vector.load %arg1[%c0, %c0_0, %c0_1] : memref<1x16x192xf32, #tpu.memory_space<vmem>>, vector<1x16x192xf32>
    %1 = vector.shape_cast %0 : vector<1x16x192xf32> to vector<16x192xf32>
    %2 = arith.truncf %1 : vector<16x192xf32> to vector<16x192xbf16>
    %c0_2 = arith.constant 0 : index
    %c0_3 = arith.constant 0 : index
    %3 = vector.load %arg3[%c0_2, %c0_3] : memref<192x576xbf16, #tpu.memory_space<vmem>>, vector<192x576xbf16>
    %cst = arith.constant dense<0.000000e+00> : vector<16x576xf32>
    %4 = tpu.matmul %2, %3, %cst {dimension_numbers = #tpu.dot_dimension_numbers<[1], [0], [0], [1], [0, 0, 1, 1], [], []>} : vector<16x192xbf16>, vector<192x576xbf16>, vector<16x576xf32> -> vector<16x576xf32>
    %c0_4 = arith.constant 0 : index
    %c0_5 = arith.constant 0 : index
    %5 = vector.load %arg4[%c0_4, %c0_5] : memref<1x576xf32, #tpu.memory_space<vmem>>, vector<1x576xf32>
    %6 = vector.broadcast %5 : vector<1x576xf32> to vector<16x576xf32>
    %7 = arith.addf %4, %6 : vector<16x576xf32>
    %c0_6 = arith.constant 0 : index
    %c0_7 = arith.constant 0 : index
    %c0_8 = arith.constant 0 : index
    %c0_9 = arith.constant 0 : index
    %8 = vector.load %arg2[%c0_6, %c0_7, %c0_8, %c0_9] : memref<1x1x1x16xf32, #tpu.memory_space<vmem>>, vector<1x1x1x16xf32>
    %9 = vector.shape_cast %8 : vector<1x1x1x16xf32> to vector<1x16xf32>
    %10 = vector.extract_strided_slice %7 {offsets = [0, 0], sizes = [16, 16], strides = [1, 1]} : vector<16x576xf32> to vector<16x16xf32>
    %11 = arith.truncf %10 : vector<16x16xf32> to vector<16x16xbf16>
    %12 = vector.extract_strided_slice %7 {offsets = [0, 192], sizes = [16, 16], strides = [1, 1]} : vector<16x576xf32> to vector<16x16xf32>
    %13 = arith.truncf %12 : vector<16x16xf32> to vector<16x16xbf16>
    %14 = vector.extract_strided_slice %7 {offsets = [0, 384], sizes = [16, 16], strides = [1, 1]} : vector<16x576xf32> to vector<16x16xf32>
    %15 = arith.truncf %14 : vector<16x16xf32> to vector<16x16xbf16>
    %cst_10 = arith.constant dense<0.000000e+00> : vector<16x16xf32>
    %16 = tpu.matmul %11, %13, %cst_10 {dimension_numbers = #tpu.dot_dimension_numbers<[1], [1], [0], [0], [0, 0, 1, 0], [], []>} : vector<16x16xbf16>, vector<16x16xbf16>, vector<16x16xf32> -> vector<16x16xf32>
    %cst_11 = arith.constant 2.500000e-01 : f32
    %17 = vector.broadcast %cst_11 : f32 to vector<16x16xf32>
    %18 = arith.mulf %16, %17 : vector<16x16xf32>
    %19 = vector.broadcast %9 : vector<1x16xf32> to vector<16x16xf32>
    %20 = arith.addf %18, %19 : vector<16x16xf32>
    %cst_12 = arith.constant dense<0xFF800000> : vector<16xf32>
    %21 = vector.multi_reduction <maximumf>, %20, %cst_12 [1] : vector<16x16xf32> to vector<16xf32>
    %22 = vector.shape_cast %21 : vector<16xf32> to vector<16x1xf32>
    %23 = vector.broadcast %22 : vector<16x1xf32> to vector<16x16xf32>
    %24 = arith.subf %20, %23 : vector<16x16xf32>
    %25 = math.exp %24 : vector<16x16xf32>
    %cst_13 = arith.constant dense<0.000000e+00> : vector<16xf32>
    %26 = vector.multi_reduction <add>, %25, %cst_13 [1] : vector<16x16xf32> to vector<16xf32>
    %27 = vector.shape_cast %26 : vector<16xf32> to vector<16x1xf32>
    %28 = tpu.reciprocal %27 {approx = true} : vector<16x1xf32> -> vector<16x1xf32>
    %29 = vector.broadcast %28 : vector<16x1xf32> to vector<16x16xf32>
    %30 = arith.mulf %25, %29 : vector<16x16xf32>
    %31 = arith.truncf %30 : vector<16x16xf32> to vector<16x16xbf16>
    %cst_14 = arith.constant dense<0.000000e+00> : vector<16x16xf32>
    %32 = tpu.matmul %31, %15, %cst_14 {dimension_numbers = #tpu.dot_dimension_numbers<[1], [0], [0], [1], [0, 0, 1, 1], [], []>} : vector<16x16xbf16>, vector<16x16xbf16>, vector<16x16xf32> -> vector<16x16xf32>
    %c0_15 = arith.constant 0 : index
    %c0_16 = arith.constant 0 : index
    %33 = vector.load %arg6[%c0_15, %c0_16] : memref<16x192xf32, #tpu.memory_space<vmem>>, vector<16x16xf32>
    tpu.vector_store %arg6[%c0_15, %c0_16], %32 {strides = array<i32>} : memref<16x192xf32, #tpu.memory_space<vmem>>, vector<16x16xf32>,
    %34 = vector.extract_strided_slice %7 {offsets = [0, 16], sizes = [16, 16], strides = [1, 1]} : vector<16x576xf32> to vector<16x16xf32>
    %35 = arith.truncf %34 : vector<16x16xf32> to vector<16x16xbf16>
    %36 = vector.extract_strided_slice %7 {offsets = [0, 208], sizes = [16, 16], strides = [1, 1]} : vector<16x576xf32> to vector<16x16xf32>
    %37 = arith.truncf %36 : vector<16x16xf32> to vector<16x16xbf16>
    %38 = vector.extract_strided_slice %7 {offsets = [0, 400], sizes = [16, 16], strides = [1, 1]} : vector<16x576xf32> to vector<16x16xf32>
    %39 = arith.truncf %38 : vector<16x16xf32> to vector<16x16xbf16>
    %cst_17 = arith.constant dense<0.000000e+00> : vector<16x16xf32>
    %40 = tpu.matmul %35, %37, %cst_17 {dimension_numbers = #tpu.dot_dimension_numbers<[1], [1], [0], [0], [0, 0, 1, 0], [], []>} : vector<16x16xbf16>, vector<16x16xbf16>, vector<16x16xf32> -> vector<16x16xf32>
    %cst_18 = arith.constant 2.500000e-01 : f32
    %41 = vector.broadcast %cst_18 : f32 to vector<16x16xf32>
    %42 = arith.mulf %40, %41 : vector<16x16xf32>
    %43 = vector.broadcast %9 : vector<1x16xf32> to vector<16x16xf32>
    %44 = arith.addf %42, %43 : vector<16x16xf32>
    %cst_19 = arith.constant dense<0xFF800000> : vector<16xf32>
    %45 = vector.multi_reduction <maximumf>, %44, %cst_19 [1] : vector<16x16xf32> to vector<16xf32>
    %46 = vector.shape_cast %45 : vector<16xf32> to vector<16x1xf32>
    %47 = vector.broadcast %46 : vector<16x1xf32> to vector<16x16xf32>
    %48 = arith.subf %44, %47 : vector<16x16xf32>
    %49 = math.exp %48 : vector<16x16xf32>
    %cst_20 = arith.constant dense<0.000000e+00> : vector<16xf32>
    %50 = vector.multi_reduction <add>, %49, %cst_20 [1] : vector<16x16xf32> to vector<16xf32>
    %51 = vector.shape_cast %50 : vector<16xf32> to vector<16x1xf32>
    %52 = tpu.reciprocal %51 {approx = true} : vector<16x1xf32> -> vector<16x1xf32>
    %53 = vector.broadcast %52 : vector<16x1xf32> to vector<16x16xf32>
    %54 = arith.mulf %49, %53 : vector<16x16xf32>
    %55 = arith.truncf %54 : vector<16x16xf32> to vector<16x16xbf16>
    %cst_21 = arith.constant dense<0.000000e+00> : vector<16x16xf32>
    %56 = tpu.matmul %55, %39, %cst_21 {dimension_numbers = #tpu.dot_dimension_numbers<[1], [0], [0], [1], [0, 0, 1, 1], [], []>} : vector<16x16xbf16>, vector<16x16xbf16>, vector<16x16xf32> -> vector<16x16xf32>
    %c0_22 = arith.constant 0 : index
    %c16 = arith.constant 16 : index
    %57 = vector.load %arg6[%c0_22, %c16] : memref<16x192xf32, #tpu.memory_space<vmem>>, vector<16x16xf32>
    tpu.vector_store %arg6[%c0_22, %c16], %56 {strides = array<i32>} : memref<16x192xf32, #tpu.memory_space<vmem>>, vector<16x16xf32>,
    %58 = vector.extract_strided_slice %7 {offsets = [0, 32], sizes = [16, 16], strides = [1, 1]} : vector<16x576xf32> to vector<16x16xf32>
    %59 = arith.truncf %58 : vector<16x16xf32> to vector<16x16xbf16>
    %60 = vector.extract_strided_slice %7 {offsets = [0, 224], sizes = [16, 16], strides = [1, 1]} : vector<16x576xf32> to vector<16x16xf32>
    %61 = arith.truncf %60 : vector<16x16xf32> to vector<16x16xbf16>
    %62 = vector.extract_strided_slice %7 {offsets = [0, 416], sizes = [16, 16], strides = [1, 1]} : vector<16x576xf32> to vector<16x16xf32>
    %63 = arith.truncf %62 : vector<16x16xf32> to vector<16x16xbf16>
    %cst_23 = arith.constant dense<0.000000e+00> : vector<16x16xf32>
    %64 = tpu.matmul %59, %61, %cst_23 {dimension_numbers = #tpu.dot_dimension_numbers<[1], [1], [0], [0], [0, 0, 1, 0], [], []>} : vector<16x16xbf16>, vector<16x16xbf16>, vector<16x16xf32> -> vector<16x16xf32>
    %cst_24 = arith.constant 2.500000e-01 : f32
    %65 = vector.broadcast %cst_24 : f32 to vector<16x16xf32>
    %66 = arith.mulf %64, %65 : vector<16x16xf32>
    %67 = vector.broadcast %9 : vector<1x16xf32> to vector<16x16xf32>
    %68 = arith.addf %66, %67 : vector<16x16xf32>
    %cst_25 = arith.constant dense<0xFF800000> : vector<16xf32>
    %69 = vector.multi_reduction <maximumf>, %68, %cst_25 [1] : vector<16x16xf32> to vector<16xf32>
    %70 = vector.shape_cast %69 : vector<16xf32> to vector<16x1xf32>
    %71 = vector.broadcast %70 : vector<16x1xf32> to vector<16x16xf32>
    %72 = arith.subf %68, %71 : vector<16x16xf32>
    %73 = math.exp %72 : vector<16x16xf32>
    %cst_26 = arith.constant dense<0.000000e+00> : vector<16xf32>
    %74 = vector.multi_reduction <add>, %73, %cst_26 [1] : vector<16x16xf32> to vector<16xf32>
    %75 = vector.shape_cast %74 : vector<16xf32> to vector<16x1xf32>
    %76 = tpu.reciprocal %75 {approx = true} : vector<16x1xf32> -> vector<16x1xf32>
    %77 = vector.broadcast %76 : vector<16x1xf32> to vector<16x16xf32>
    %78 = arith.mulf %73, %77 : vector<16x16xf32>
    %79 = arith.truncf %78 : vector<16x16xf32> to vector<16x16xbf16>
    %cst_27 = arith.constant dense<0.000000e+00> : vector<16x16xf32>
    %80 = tpu.matmul %79, %63, %cst_27 {dimension_numbers = #tpu.dot_dimension_numbers<[1], [0], [0], [1], [0, 0, 1, 1], [], []>} : vector<16x16xbf16>, vector<16x16xbf16>, vector<16x16xf32> -> vector<16x16xf32>
    %c0_28 = arith.constant 0 : index
    %c32 = arith.constant 32 : index
    %81 = vector.load %arg6[%c0_28, %c32] : memref<16x192xf32, #tpu.memory_space<vmem>>, vector<16x16xf32>
    tpu.vector_store %arg6[%c0_28, %c32], %80 {strides = array<i32>} : memref<16x192xf32, #tpu.memory_space<vmem>>, vector<16x16xf32>,
    %82 = vector.extract_strided_slice %7 {offsets = [0, 48], sizes = [16, 16], strides = [1, 1]} : vector<16x576xf32> to vector<16x16xf32>
    %83 = arith.truncf %82 : vector<16x16xf32> to vector<16x16xbf16>
    %84 = vector.extract_strided_slice %7 {offsets = [0, 240], sizes = [16, 16], strides = [1, 1]} : vector<16x576xf32> to vector<16x16xf32>
    %85 = arith.truncf %84 : vector<16x16xf32> to vector<16x16xbf16>
    %86 = vector.extract_strided_slice %7 {offsets = [0, 432], sizes = [16, 16], strides = [1, 1]} : vector<16x576xf32> to vector<16x16xf32>
    %87 = arith.truncf %86 : vector<16x16xf32> to vector<16x16xbf16>
    %cst_29 = arith.constant dense<0.000000e+00> : vector<16x16xf32>
    %88 = tpu.matmul %83, %85, %cst_29 {dimension_numbers = #tpu.dot_dimension_numbers<[1], [1], [0], [0], [0, 0, 1, 0], [], []>} : vector<16x16xbf16>, vector<16x16xbf16>, vector<16x16xf32> -> vector<16x16xf32>
    %cst_30 = arith.constant 2.500000e-01 : f32
    %89 = vector.broadcast %cst_30 : f32 to vector<16x16xf32>
    %90 = arith.mulf %88, %89 : vector<16x16xf32>
    %91 = vector.broadcast %9 : vector<1x16xf32> to vector<16x16xf32>
    %92 = arith.addf %90, %91 : vector<16x16xf32>
    %cst_31 = arith.constant dense<0xFF800000> : vector<16xf32>
    %93 = vector.multi_reduction <maximumf>, %92, %cst_31 [1] : vector<16x16xf32> to vector<16xf32>
    %94 = vector.shape_cast %93 : vector<16xf32> to vector<16x1xf32>
    %95 = vector.broadcast %94 : vector<16x1xf32> to vector<16x16xf32>
    %96 = arith.subf %92, %95 : vector<16x16xf32>
    %97 = math.exp %96 : vector<16x16xf32>
    %cst_32 = arith.constant dense<0.000000e+00> : vector<16xf32>
    %98 = vector.multi_reduction <add>, %97, %cst_32 [1] : vector<16x16xf32> to vector<16xf32>
    %99 = vector.shape_cast %98 : vector<16xf32> to vector<16x1xf32>
    %100 = tpu.reciprocal %99 {approx = true} : vector<16x1xf32> -> vector<16x1xf32>
    %101 = vector.broadcast %100 : vector<16x1xf32> to vector<16x16xf32>
    %102 = arith.mulf %97, %101 : vector<16x16xf32>
    %103 = arith.truncf %102 : vector<16x16xf32> to vector<16x16xbf16>
    %cst_33 = arith.constant dense<0.000000e+00> : vector<16x16xf32>
    %104 = tpu.matmul %103, %87, %cst_33 {dimension_numbers = #tpu.dot_dimension_numbers<[1], [0], [0], [1], [0, 0, 1, 1], [], []>} : vector<16x16xbf16>, vector<16x16xbf16>, vector<16x16xf32> -> vector<16x16xf32>
    %c0_34 = arith.constant 0 : index
    %c48 = arith.constant 48 : index
    %105 = vector.load %arg6[%c0_34, %c48] : memref<16x192xf32, #tpu.memory_space<vmem>>, vector<16x16xf32>
    tpu.vector_store %arg6[%c0_34, %c48], %104 {strides = array<i32>} : memref<16x192xf32, #tpu.memory_space<vmem>>, vector<16x16xf32>,
    %106 = vector.extract_strided_slice %7 {offsets = [0, 64], sizes = [16, 16], strides = [1, 1]} : vector<16x576xf32> to vector<16x16xf32>
    %107 = arith.truncf %106 : vector<16x16xf32> to vector<16x16xbf16>
    %108 = vector.extract_strided_slice %7 {offsets = [0, 256], sizes = [16, 16], strides = [1, 1]} : vector<16x576xf32> to vector<16x16xf32>
    %109 = arith.truncf %108 : vector<16x16xf32> to vector<16x16xbf16>
    %110 = vector.extract_strided_slice %7 {offsets = [0, 448], sizes = [16, 16], strides = [1, 1]} : vector<16x576xf32> to vector<16x16xf32>
    %111 = arith.truncf %110 : vector<16x16xf32> to vector<16x16xbf16>
    %cst_35 = arith.constant dense<0.000000e+00> : vector<16x16xf32>
    %112 = tpu.matmul %107, %109, %cst_35 {dimension_numbers = #tpu.dot_dimension_numbers<[1], [1], [0], [0], [0, 0, 1, 0], [], []>} : vector<16x16xbf16>, vector<16x16xbf16>, vector<16x16xf32> -> vector<16x16xf32>
    %cst_36 = arith.constant 2.500000e-01 : f32
    %113 = vector.broadcast %cst_36 : f32 to vector<16x16xf32>
    %114 = arith.mulf %112, %113 : vector<16x16xf32>
    %115 = vector.broadcast %9 : vector<1x16xf32> to vector<16x16xf32>
    %116 = arith.addf %114, %115 : vector<16x16xf32>
    %cst_37 = arith.constant dense<0xFF800000> : vector<16xf32>
    %117 = vector.multi_reduction <maximumf>, %116, %cst_37 [1] : vector<16x16xf32> to vector<16xf32>
    %118 = vector.shape_cast %117 : vector<16xf32> to vector<16x1xf32>
    %119 = vector.broadcast %118 : vector<16x1xf32> to vector<16x16xf32>
    %120 = arith.subf %116, %119 : vector<16x16xf32>
    %121 = math.exp %120 : vector<16x16xf32>
    %cst_38 = arith.constant dense<0.000000e+00> : vector<16xf32>
    %122 = vector.multi_reduction <add>, %121, %cst_38 [1] : vector<16x16xf32> to vector<16xf32>
    %123 = vector.shape_cast %122 : vector<16xf32> to vector<16x1xf32>
    %124 = tpu.reciprocal %123 {approx = true} : vector<16x1xf32> -> vector<16x1xf32>
    %125 = vector.broadcast %124 : vector<16x1xf32> to vector<16x16xf32>
    %126 = arith.mulf %121, %125 : vector<16x16xf32>
    %127 = arith.truncf %126 : vector<16x16xf32> to vector<16x16xbf16>
    %cst_39 = arith.constant dense<0.000000e+00> : vector<16x16xf32>
    %128 = tpu.matmul %127, %111, %cst_39 {dimension_numbers = #tpu.dot_dimension_numbers<[1], [0], [0], [1], [0, 0, 1, 1], [], []>} : vector<16x16xbf16>, vector<16x16xbf16>, vector<16x16xf32> -> vector<16x16xf32>
    %c0_40 = arith.constant 0 : index
    %c64 = arith.constant 64 : index
    %129 = vector.load %arg6[%c0_40, %c64] : memref<16x192xf32, #tpu.memory_space<vmem>>, vector<16x16xf32>
    tpu.vector_store %arg6[%c0_40, %c64], %128 {strides = array<i32>} : memref<16x192xf32, #tpu.memory_space<vmem>>, vector<16x16xf32>,
    %130 = vector.extract_strided_slice %7 {offsets = [0, 80], sizes = [16, 16], strides = [1, 1]} : vector<16x576xf32> to vector<16x16xf32>
    %131 = arith.truncf %130 : vector<16x16xf32> to vector<16x16xbf16>
    %132 = vector.extract_strided_slice %7 {offsets = [0, 272], sizes = [16, 16], strides = [1, 1]} : vector<16x576xf32> to vector<16x16xf32>
    %133 = arith.truncf %132 : vector<16x16xf32> to vector<16x16xbf16>
    %134 = vector.extract_strided_slice %7 {offsets = [0, 464], sizes = [16, 16], strides = [1, 1]} : vector<16x576xf32> to vector<16x16xf32>
    %135 = arith.truncf %134 : vector<16x16xf32> to vector<16x16xbf16>
    %cst_41 = arith.constant dense<0.000000e+00> : vector<16x16xf32>
    %136 = tpu.matmul %131, %133, %cst_41 {dimension_numbers = #tpu.dot_dimension_numbers<[1], [1], [0], [0], [0, 0, 1, 0], [], []>} : vector<16x16xbf16>, vector<16x16xbf16>, vector<16x16xf32> -> vector<16x16xf32>
    %cst_42 = arith.constant 2.500000e-01 : f32
    %137 = vector.broadcast %cst_42 : f32 to vector<16x16xf32>
    %138 = arith.mulf %136, %137 : vector<16x16xf32>
    %139 = vector.broadcast %9 : vector<1x16xf32> to vector<16x16xf32>
    %140 = arith.addf %138, %139 : vector<16x16xf32>
    %cst_43 = arith.constant dense<0xFF800000> : vector<16xf32>
    %141 = vector.multi_reduction <maximumf>, %140, %cst_43 [1] : vector<16x16xf32> to vector<16xf32>
    %142 = vector.shape_cast %141 : vector<16xf32> to vector<16x1xf32>
    %143 = vector.broadcast %142 : vector<16x1xf32> to vector<16x16xf32>
    %144 = arith.subf %140, %143 : vector<16x16xf32>
    %145 = math.exp %144 : vector<16x16xf32>
    %cst_44 = arith.constant dense<0.000000e+00> : vector<16xf32>
    %146 = vector.multi_reduction <add>, %145, %cst_44 [1] : vector<16x16xf32> to vector<16xf32>
    %147 = vector.shape_cast %146 : vector<16xf32> to vector<16x1xf32>
    %148 = tpu.reciprocal %147 {approx = true} : vector<16x1xf32> -> vector<16x1xf32>
    %149 = vector.broadcast %148 : vector<16x1xf32> to vector<16x16xf32>
    %150 = arith.mulf %145, %149 : vector<16x16xf32>
    %151 = arith.truncf %150 : vector<16x16xf32> to vector<16x16xbf16>
    %cst_45 = arith.constant dense<0.000000e+00> : vector<16x16xf32>
    %152 = tpu.matmul %151, %135, %cst_45 {dimension_numbers = #tpu.dot_dimension_numbers<[1], [0], [0], [1], [0, 0, 1, 1], [], []>} : vector<16x16xbf16>, vector<16x16xbf16>, vector<16x16xf32> -> vector<16x16xf32>
    %c0_46 = arith.constant 0 : index
    %c80 = arith.constant 80 : index
    %153 = vector.load %arg6[%c0_46, %c80] : memref<16x192xf32, #tpu.memory_space<vmem>>, vector<16x16xf32>
    tpu.vector_store %arg6[%c0_46, %c80], %152 {strides = array<i32>} : memref<16x192xf32, #tpu.memory_space<vmem>>, vector<16x16xf32>,
    %154 = vector.extract_strided_slice %7 {offsets = [0, 96], sizes = [16, 16], strides = [1, 1]} : vector<16x576xf32> to vector<16x16xf32>
    %155 = arith.truncf %154 : vector<16x16xf32> to vector<16x16xbf16>
    %156 = vector.extract_strided_slice %7 {offsets = [0, 288], sizes = [16, 16], strides = [1, 1]} : vector<16x576xf32> to vector<16x16xf32>
    %157 = arith.truncf %156 : vector<16x16xf32> to vector<16x16xbf16>
    %158 = vector.extract_strided_slice %7 {offsets = [0, 480], sizes = [16, 16], strides = [1, 1]} : vector<16x576xf32> to vector<16x16xf32>
    %159 = arith.truncf %158 : vector<16x16xf32> to vector<16x16xbf16>
    %cst_47 = arith.constant dense<0.000000e+00> : vector<16x16xf32>
    %160 = tpu.matmul %155, %157, %cst_47 {dimension_numbers = #tpu.dot_dimension_numbers<[1], [1], [0], [0], [0, 0, 1, 0], [], []>} : vector<16x16xbf16>, vector<16x16xbf16>, vector<16x16xf32> -> vector<16x16xf32>
    %cst_48 = arith.constant 2.500000e-01 : f32
    %161 = vector.broadcast %cst_48 : f32 to vector<16x16xf32>
    %162 = arith.mulf %160, %161 : vector<16x16xf32>
    %163 = vector.broadcast %9 : vector<1x16xf32> to vector<16x16xf32>
    %164 = arith.addf %162, %163 : vector<16x16xf32>
    %cst_49 = arith.constant dense<0xFF800000> : vector<16xf32>
    %165 = vector.multi_reduction <maximumf>, %164, %cst_49 [1] : vector<16x16xf32> to vector<16xf32>
    %166 = vector.shape_cast %165 : vector<16xf32> to vector<16x1xf32>
    %167 = vector.broadcast %166 : vector<16x1xf32> to vector<16x16xf32>
    %168 = arith.subf %164, %167 : vector<16x16xf32>
    %169 = math.exp %168 : vector<16x16xf32>
    %cst_50 = arith.constant dense<0.000000e+00> : vector<16xf32>
    %170 = vector.multi_reduction <add>, %169, %cst_50 [1] : vector<16x16xf32> to vector<16xf32>
    %171 = vector.shape_cast %170 : vector<16xf32> to vector<16x1xf32>
    %172 = tpu.reciprocal %171 {approx = true} : vector<16x1xf32> -> vector<16x1xf32>
    %173 = vector.broadcast %172 : vector<16x1xf32> to vector<16x16xf32>
    %174 = arith.mulf %169, %173 : vector<16x16xf32>
    %175 = arith.truncf %174 : vector<16x16xf32> to vector<16x16xbf16>
    %cst_51 = arith.constant dense<0.000000e+00> : vector<16x16xf32>
    %176 = tpu.matmul %175, %159, %cst_51 {dimension_numbers = #tpu.dot_dimension_numbers<[1], [0], [0], [1], [0, 0, 1, 1], [], []>} : vector<16x16xbf16>, vector<16x16xbf16>, vector<16x16xf32> -> vector<16x16xf32>
    %c0_52 = arith.constant 0 : index
    %c96 = arith.constant 96 : index
    %177 = vector.load %arg6[%c0_52, %c96] : memref<16x192xf32, #tpu.memory_space<vmem>>, vector<16x16xf32>
    tpu.vector_store %arg6[%c0_52, %c96], %176 {strides = array<i32>} : memref<16x192xf32, #tpu.memory_space<vmem>>, vector<16x16xf32>,
    %178 = vector.extract_strided_slice %7 {offsets = [0, 112], sizes = [16, 16], strides = [1, 1]} : vector<16x576xf32> to vector<16x16xf32>
    %179 = arith.truncf %178 : vector<16x16xf32> to vector<16x16xbf16>
    %180 = vector.extract_strided_slice %7 {offsets = [0, 304], sizes = [16, 16], strides = [1, 1]} : vector<16x576xf32> to vector<16x16xf32>
    %181 = arith.truncf %180 : vector<16x16xf32> to vector<16x16xbf16>
    %182 = vector.extract_strided_slice %7 {offsets = [0, 496], sizes = [16, 16], strides = [1, 1]} : vector<16x576xf32> to vector<16x16xf32>
    %183 = arith.truncf %182 : vector<16x16xf32> to vector<16x16xbf16>
    %cst_53 = arith.constant dense<0.000000e+00> : vector<16x16xf32>
    %184 = tpu.matmul %179, %181, %cst_53 {dimension_numbers = #tpu.dot_dimension_numbers<[1], [1], [0], [0], [0, 0, 1, 0], [], []>} : vector<16x16xbf16>, vector<16x16xbf16>, vector<16x16xf32> -> vector<16x16xf32>
    %cst_54 = arith.constant 2.500000e-01 : f32
    %185 = vector.broadcast %cst_54 : f32 to vector<16x16xf32>
    %186 = arith.mulf %184, %185 : vector<16x16xf32>
    %187 = vector.broadcast %9 : vector<1x16xf32> to vector<16x16xf32>
    %188 = arith.addf %186, %187 : vector<16x16xf32>
    %cst_55 = arith.constant dense<0xFF800000> : vector<16xf32>
    %189 = vector.multi_reduction <maximumf>, %188, %cst_55 [1] : vector<16x16xf32> to vector<16xf32>
    %190 = vector.shape_cast %189 : vector<16xf32> to vector<16x1xf32>
    %191 = vector.broadcast %190 : vector<16x1xf32> to vector<16x16xf32>
    %192 = arith.subf %188, %191 : vector<16x16xf32>
    %193 = math.exp %192 : vector<16x16xf32>
    %cst_56 = arith.constant dense<0.000000e+00> : vector<16xf32>
    %194 = vector.multi_reduction <add>, %193, %cst_56 [1] : vector<16x16xf32> to vector<16xf32>
    %195 = vector.shape_cast %194 : vector<16xf32> to vector<16x1xf32>
    %196 = tpu.reciprocal %195 {approx = true} : vector<16x1xf32> -> vector<16x1xf32>
    %197 = vector.broadcast %196 : vector<16x1xf32> to vector<16x16xf32>
    %198 = arith.mulf %193, %197 : vector<16x16xf32>
    %199 = arith.truncf %198 : vector<16x16xf32> to vector<16x16xbf16>
    %cst_57 = arith.constant dense<0.000000e+00> : vector<16x16xf32>
    %200 = tpu.matmul %199, %183, %cst_57 {dimension_numbers = #tpu.dot_dimension_numbers<[1], [0], [0], [1], [0, 0, 1, 1], [], []>} : vector<16x16xbf16>, vector<16x16xbf16>, vector<16x16xf32> -> vector<16x16xf32>
    %c0_58 = arith.constant 0 : index
    %c112 = arith.constant 112 : index
    %201 = vector.load %arg6[%c0_58, %c112] : memref<16x192xf32, #tpu.memory_space<vmem>>, vector<16x16xf32>
    tpu.vector_store %arg6[%c0_58, %c112], %200 {strides = array<i32>} : memref<16x192xf32, #tpu.memory_space<vmem>>, vector<16x16xf32>,
    %202 = vector.extract_strided_slice %7 {offsets = [0, 128], sizes = [16, 16], strides = [1, 1]} : vector<16x576xf32> to vector<16x16xf32>
    %203 = arith.truncf %202 : vector<16x16xf32> to vector<16x16xbf16>
    %204 = vector.extract_strided_slice %7 {offsets = [0, 320], sizes = [16, 16], strides = [1, 1]} : vector<16x576xf32> to vector<16x16xf32>
    %205 = arith.truncf %204 : vector<16x16xf32> to vector<16x16xbf16>
    %206 = vector.extract_strided_slice %7 {offsets = [0, 512], sizes = [16, 16], strides = [1, 1]} : vector<16x576xf32> to vector<16x16xf32>
    %207 = arith.truncf %206 : vector<16x16xf32> to vector<16x16xbf16>
    %cst_59 = arith.constant dense<0.000000e+00> : vector<16x16xf32>
    %208 = tpu.matmul %203, %205, %cst_59 {dimension_numbers = #tpu.dot_dimension_numbers<[1], [1], [0], [0], [0, 0, 1, 0], [], []>} : vector<16x16xbf16>, vector<16x16xbf16>, vector<16x16xf32> -> vector<16x16xf32>
    %cst_60 = arith.constant 2.500000e-01 : f32
    %209 = vector.broadcast %cst_60 : f32 to vector<16x16xf32>
    %210 = arith.mulf %208, %209 : vector<16x16xf32>
    %211 = vector.broadcast %9 : vector<1x16xf32> to vector<16x16xf32>
    %212 = arith.addf %210, %211 : vector<16x16xf32>
    %cst_61 = arith.constant dense<0xFF800000> : vector<16xf32>
    %213 = vector.multi_reduction <maximumf>, %212, %cst_61 [1] : vector<16x16xf32> to vector<16xf32>
    %214 = vector.shape_cast %213 : vector<16xf32> to vector<16x1xf32>
    %215 = vector.broadcast %214 : vector<16x1xf32> to vector<16x16xf32>
    %216 = arith.subf %212, %215 : vector<16x16xf32>
    %217 = math.exp %216 : vector<16x16xf32>
    %cst_62 = arith.constant dense<0.000000e+00> : vector<16xf32>
    %218 = vector.multi_reduction <add>, %217, %cst_62 [1] : vector<16x16xf32> to vector<16xf32>
    %219 = vector.shape_cast %218 : vector<16xf32> to vector<16x1xf32>
    %220 = tpu.reciprocal %219 {approx = true} : vector<16x1xf32> -> vector<16x1xf32>
    %221 = vector.broadcast %220 : vector<16x1xf32> to vector<16x16xf32>
    %222 = arith.mulf %217, %221 : vector<16x16xf32>
    %223 = arith.truncf %222 : vector<16x16xf32> to vector<16x16xbf16>
    %cst_63 = arith.constant dense<0.000000e+00> : vector<16x16xf32>
    %224 = tpu.matmul %223, %207, %cst_63 {dimension_numbers = #tpu.dot_dimension_numbers<[1], [0], [0], [1], [0, 0, 1, 1], [], []>} : vector<16x16xbf16>, vector<16x16xbf16>, vector<16x16xf32> -> vector<16x16xf32>
    %c0_64 = arith.constant 0 : index
    %c128 = arith.constant 128 : index
    %225 = vector.load %arg6[%c0_64, %c128] : memref<16x192xf32, #tpu.memory_space<vmem>>, vector<16x16xf32>
    tpu.vector_store %arg6[%c0_64, %c128], %224 {strides = array<i32>} : memref<16x192xf32, #tpu.memory_space<vmem>>, vector<16x16xf32>,
    %226 = vector.extract_strided_slice %7 {offsets = [0, 144], sizes = [16, 16], strides = [1, 1]} : vector<16x576xf32> to vector<16x16xf32>
    %227 = arith.truncf %226 : vector<16x16xf32> to vector<16x16xbf16>
    %228 = vector.extract_strided_slice %7 {offsets = [0, 336], sizes = [16, 16], strides = [1, 1]} : vector<16x576xf32> to vector<16x16xf32>
    %229 = arith.truncf %228 : vector<16x16xf32> to vector<16x16xbf16>
    %230 = vector.extract_strided_slice %7 {offsets = [0, 528], sizes = [16, 16], strides = [1, 1]} : vector<16x576xf32> to vector<16x16xf32>
    %231 = arith.truncf %230 : vector<16x16xf32> to vector<16x16xbf16>
    %cst_65 = arith.constant dense<0.000000e+00> : vector<16x16xf32>
    %232 = tpu.matmul %227, %229, %cst_65 {dimension_numbers = #tpu.dot_dimension_numbers<[1], [1], [0], [0], [0, 0, 1, 0], [], []>} : vector<16x16xbf16>, vector<16x16xbf16>, vector<16x16xf32> -> vector<16x16xf32>
    %cst_66 = arith.constant 2.500000e-01 : f32
    %233 = vector.broadcast %cst_66 : f32 to vector<16x16xf32>
    %234 = arith.mulf %232, %233 : vector<16x16xf32>
    %235 = vector.broadcast %9 : vector<1x16xf32> to vector<16x16xf32>
    %236 = arith.addf %234, %235 : vector<16x16xf32>
    %cst_67 = arith.constant dense<0xFF800000> : vector<16xf32>
    %237 = vector.multi_reduction <maximumf>, %236, %cst_67 [1] : vector<16x16xf32> to vector<16xf32>
    %238 = vector.shape_cast %237 : vector<16xf32> to vector<16x1xf32>
    %239 = vector.broadcast %238 : vector<16x1xf32> to vector<16x16xf32>
    %240 = arith.subf %236, %239 : vector<16x16xf32>
    %241 = math.exp %240 : vector<16x16xf32>
    %cst_68 = arith.constant dense<0.000000e+00> : vector<16xf32>
    %242 = vector.multi_reduction <add>, %241, %cst_68 [1] : vector<16x16xf32> to vector<16xf32>
    %243 = vector.shape_cast %242 : vector<16xf32> to vector<16x1xf32>
    %244 = tpu.reciprocal %243 {approx = true} : vector<16x1xf32> -> vector<16x1xf32>
    %245 = vector.broadcast %244 : vector<16x1xf32> to vector<16x16xf32>
    %246 = arith.mulf %241, %245 : vector<16x16xf32>
    %247 = arith.truncf %246 : vector<16x16xf32> to vector<16x16xbf16>
    %cst_69 = arith.constant dense<0.000000e+00> : vector<16x16xf32>
    %248 = tpu.matmul %247, %231, %cst_69 {dimension_numbers = #tpu.dot_dimension_numbers<[1], [0], [0], [1], [0, 0, 1, 1], [], []>} : vector<16x16xbf16>, vector<16x16xbf16>, vector<16x16xf32> -> vector<16x16xf32>
    %c0_70 = arith.constant 0 : index
    %c144 = arith.constant 144 : index
    %249 = vector.load %arg6[%c0_70, %c144] : memref<16x192xf32, #tpu.memory_space<vmem>>, vector<16x16xf32>
    tpu.vector_store %arg6[%c0_70, %c144], %248 {strides = array<i32>} : memref<16x192xf32, #tpu.memory_space<vmem>>, vector<16x16xf32>,
    %250 = vector.extract_strided_slice %7 {offsets = [0, 160], sizes = [16, 16], strides = [1, 1]} : vector<16x576xf32> to vector<16x16xf32>
    %251 = arith.truncf %250 : vector<16x16xf32> to vector<16x16xbf16>
    %252 = vector.extract_strided_slice %7 {offsets = [0, 352], sizes = [16, 16], strides = [1, 1]} : vector<16x576xf32> to vector<16x16xf32>
    %253 = arith.truncf %252 : vector<16x16xf32> to vector<16x16xbf16>
    %254 = vector.extract_strided_slice %7 {offsets = [0, 544], sizes = [16, 16], strides = [1, 1]} : vector<16x576xf32> to vector<16x16xf32>
    %255 = arith.truncf %254 : vector<16x16xf32> to vector<16x16xbf16>
    %cst_71 = arith.constant dense<0.000000e+00> : vector<16x16xf32>
    %256 = tpu.matmul %251, %253, %cst_71 {dimension_numbers = #tpu.dot_dimension_numbers<[1], [1], [0], [0], [0, 0, 1, 0], [], []>} : vector<16x16xbf16>, vector<16x16xbf16>, vector<16x16xf32> -> vector<16x16xf32>
    %cst_72 = arith.constant 2.500000e-01 : f32
    %257 = vector.broadcast %cst_72 : f32 to vector<16x16xf32>
    %258 = arith.mulf %256, %257 : vector<16x16xf32>
    %259 = vector.broadcast %9 : vector<1x16xf32> to vector<16x16xf32>
    %260 = arith.addf %258, %259 : vector<16x16xf32>
    %cst_73 = arith.constant dense<0xFF800000> : vector<16xf32>
    %261 = vector.multi_reduction <maximumf>, %260, %cst_73 [1] : vector<16x16xf32> to vector<16xf32>
    %262 = vector.shape_cast %261 : vector<16xf32> to vector<16x1xf32>
    %263 = vector.broadcast %262 : vector<16x1xf32> to vector<16x16xf32>
    %264 = arith.subf %260, %263 : vector<16x16xf32>
    %265 = math.exp %264 : vector<16x16xf32>
    %cst_74 = arith.constant dense<0.000000e+00> : vector<16xf32>
    %266 = vector.multi_reduction <add>, %265, %cst_74 [1] : vector<16x16xf32> to vector<16xf32>
    %267 = vector.shape_cast %266 : vector<16xf32> to vector<16x1xf32>
    %268 = tpu.reciprocal %267 {approx = true} : vector<16x1xf32> -> vector<16x1xf32>
    %269 = vector.broadcast %268 : vector<16x1xf32> to vector<16x16xf32>
    %270 = arith.mulf %265, %269 : vector<16x16xf32>
    %271 = arith.truncf %270 : vector<16x16xf32> to vector<16x16xbf16>
    %cst_75 = arith.constant dense<0.000000e+00> : vector<16x16xf32>
    %272 = tpu.matmul %271, %255, %cst_75 {dimension_numbers = #tpu.dot_dimension_numbers<[1], [0], [0], [1], [0, 0, 1, 1], [], []>} : vector<16x16xbf16>, vector<16x16xbf16>, vector<16x16xf32> -> vector<16x16xf32>
    %c0_76 = arith.constant 0 : index
    %c160 = arith.constant 160 : index
    %273 = vector.load %arg6[%c0_76, %c160] : memref<16x192xf32, #tpu.memory_space<vmem>>, vector<16x16xf32>
    tpu.vector_store %arg6[%c0_76, %c160], %272 {strides = array<i32>} : memref<16x192xf32, #tpu.memory_space<vmem>>, vector<16x16xf32>,
    %274 = vector.extract_strided_slice %7 {offsets = [0, 176], sizes = [16, 16], strides = [1, 1]} : vector<16x576xf32> to vector<16x16xf32>
    %275 = arith.truncf %274 : vector<16x16xf32> to vector<16x16xbf16>
    %276 = vector.extract_strided_slice %7 {offsets = [0, 368], sizes = [16, 16], strides = [1, 1]} : vector<16x576xf32> to vector<16x16xf32>
    %277 = arith.truncf %276 : vector<16x16xf32> to vector<16x16xbf16>
    %278 = vector.extract_strided_slice %7 {offsets = [0, 560], sizes = [16, 16], strides = [1, 1]} : vector<16x576xf32> to vector<16x16xf32>
    %279 = arith.truncf %278 : vector<16x16xf32> to vector<16x16xbf16>
    %cst_77 = arith.constant dense<0.000000e+00> : vector<16x16xf32>
    %280 = tpu.matmul %275, %277, %cst_77 {dimension_numbers = #tpu.dot_dimension_numbers<[1], [1], [0], [0], [0, 0, 1, 0], [], []>} : vector<16x16xbf16>, vector<16x16xbf16>, vector<16x16xf32> -> vector<16x16xf32>
    %cst_78 = arith.constant 2.500000e-01 : f32
    %281 = vector.broadcast %cst_78 : f32 to vector<16x16xf32>
    %282 = arith.mulf %280, %281 : vector<16x16xf32>
    %283 = vector.broadcast %9 : vector<1x16xf32> to vector<16x16xf32>
    %284 = arith.addf %282, %283 : vector<16x16xf32>
    %cst_79 = arith.constant dense<0xFF800000> : vector<16xf32>
    %285 = vector.multi_reduction <maximumf>, %284, %cst_79 [1] : vector<16x16xf32> to vector<16xf32>
    %286 = vector.shape_cast %285 : vector<16xf32> to vector<16x1xf32>
    %287 = vector.broadcast %286 : vector<16x1xf32> to vector<16x16xf32>
    %288 = arith.subf %284, %287 : vector<16x16xf32>
    %289 = math.exp %288 : vector<16x16xf32>
    %cst_80 = arith.constant dense<0.000000e+00> : vector<16xf32>
    %290 = vector.multi_reduction <add>, %289, %cst_80 [1] : vector<16x16xf32> to vector<16xf32>
    %291 = vector.shape_cast %290 : vector<16xf32> to vector<16x1xf32>
    %292 = tpu.reciprocal %291 {approx = true} : vector<16x1xf32> -> vector<16x1xf32>
    %293 = vector.broadcast %292 : vector<16x1xf32> to vector<16x16xf32>
    %294 = arith.mulf %289, %293 : vector<16x16xf32>
    %295 = arith.truncf %294 : vector<16x16xf32> to vector<16x16xbf16>
    %cst_81 = arith.constant dense<0.000000e+00> : vector<16x16xf32>
    %296 = tpu.matmul %295, %279, %cst_81 {dimension_numbers = #tpu.dot_dimension_numbers<[1], [0], [0], [1], [0, 0, 1, 1], [], []>} : vector<16x16xbf16>, vector<16x16xbf16>, vector<16x16xf32> -> vector<16x16xf32>
    %c0_82 = arith.constant 0 : index
    %c176 = arith.constant 176 : index
    %297 = vector.load %arg6[%c0_82, %c176] : memref<16x192xf32, #tpu.memory_space<vmem>>, vector<16x16xf32>
    tpu.vector_store %arg6[%c0_82, %c176], %296 {strides = array<i32>} : memref<16x192xf32, #tpu.memory_space<vmem>>, vector<16x16xf32>,
    %c0_83 = arith.constant 0 : index
    %c0_84 = arith.constant 0 : index
    %298 = vector.load %arg6[%c0_83, %c0_84] : memref<16x192xf32, #tpu.memory_space<vmem>>, vector<16x192xf32>
    %c0_85 = arith.constant 0 : index
    %c0_86 = arith.constant 0 : index
    %c0_87 = arith.constant 0 : index
    %299 = vector.load %arg5[%c0_85, %c0_86, %c0_87] : memref<1x16x192xf32, #tpu.memory_space<vmem>>, vector<1x16x192xf32>
    %300 = vector.shape_cast %299 : vector<1x16x192xf32> to vector<16x192xf32>
    %301 = vector.shape_cast %298 : vector<16x192xf32> to vector<1x16x192xf32>
    tpu.vector_store %arg5[%c0_85, %c0_86, %c0_87], %301 {strides = array<i32>} : memref<1x16x192xf32, #tpu.memory_space<vmem>>, vector<1x16x192xf32>,
    return
  }
  func.func @transform_0(%arg0: i32) -> (i32, i32, i32) {
    %c0_i32 = arith.constant 0 : i32
    %c0_i32_0 = arith.constant 0 : i32
    %c0_i32_1 = arith.constant 0 : i32
    return %arg0, %c0_i32, %c0_i32_0 : i32, i32, i32
  }
  func.func @transform_1(%arg0: i32) -> (i32, i32, i32, i32) {
    %c0_i32 = arith.constant 0 : i32
    %c0_i32_0 = arith.constant 0 : i32
    %c0_i32_1 = arith.constant 0 : i32
    %c0_i32_2 = arith.constant 0 : i32
    return %arg0, %c0_i32, %c0_i32_0, %c0_i32_1 : i32, i32, i32, i32
  }
  func.func @transform_2(%arg0: i32) -> (i32, i32) {
    %c0_i32 = arith.constant 0 : i32
    %c0_i32_0 = arith.constant 0 : i32
    %c0_i32_1 = arith.constant 0 : i32
    return %c0_i32, %c0_i32_0 : i32, i32
  }
  func.func @transform_3(%arg0: i32) -> (i32, i32) {
    %c0_i32 = arith.constant 0 : i32
    %c0_i32_0 = arith.constant 0 : i32
    %c0_i32_1 = arith.constant 0 : i32
    return %c0_i32, %c0_i32_0 : i32, i32
  }
  func.func @transform_4(%arg0: i32) -> (i32, i32, i32) {
    %c0_i32 = arith.constant 0 : i32
    %c0_i32_0 = arith.constant 0 : i32
    %c0_i32_1 = arith.constant 0 : i32
    return %arg0, %c0_i32, %c0_i32_0 : i32, i32, i32
  }
}

</mosaic_0001>

<llo_original>
// kernel: tpu_custom_call.1
$region0: #{tpu_custom_call.1}
  #allocation0 [shape = 'u32[]', space=smem, size = 0x4, offset = 0x4, fixed_abs, tag = 'smem constant byte address 0x4 - core index']
  #allocation1 [shape = 'u32[144,128]{1,0:T(1,128)}', space=vmem, size = 0x12000, scoped, tag = 'internal scratch']
  #allocation2 [shape = 'f32[16,192]{1,0:T(8,128)}', space=vmem, size = 0x4000, scoped, tag = 'scratch operand']
  %s0 = inlined_call_operand.hbm [shape: f32[2,16,192], index: 0, kind: input, shape index: {}]
  %s1 = inlined_call_operand.hbm [shape: f32[2,1,1,16], index: 1, kind: input, shape index: {}]
  %s2 = inlined_call_operand.hbm [shape: bf16[192,576], index: 2, kind: input, shape index: {}]
  %s3 = inlined_call_operand.vmem [shape: f32[1,576], index: 3, kind: input, shape index: {}]
  %s4 = inlined_call_operand.hbm [shape: f32[2,16,192], index: 4, kind: output, shape index: {}]
  %s5 = sld [smem:[#allocation0]]
  $region61: #{tpu_custom_call.1} parent=0
    _
  %s7 = ssub.s32 1, %s5
  %s8 = scalar_select 0, %s7, %s5
  $region1: #{tpu_custom_call.1} parent=0
    #allocation3 [shape = 'u8[32768]{0}', space=vmem, size = 0x8000, scoped, tag = 'input window, operand 0']
    #allocation4 [shape = 's32[2]{0}', space=sflag, size = 0x8, scoped, tag = 'scoped memory for tpu_custom_call.1']
    #allocation5 [shape = 's32[2]{0}', space=sflag, size = 0x8, scoped, tag = 'scoped memory for tpu_custom_call.1']
    #allocation6 [shape = 'u8[1024]{0}', space=vmem, size = 0x400, scoped, tag = 'input window, operand 1']
    #allocation7 [shape = 's32[2]{0}', space=sflag, size = 0x8, scoped, tag = 'scoped memory for tpu_custom_call.1']
    #allocation8 [shape = 'u8[245760]{0}', space=vmem, size = 0x3c000, scoped, tag = 'input window, operand 2, single buffered']
    #allocation9 [shape = 'u8[32768]{0}', space=vmem, size = 0x8000, scoped, tag = 'output window, operand 0']
    %9 = vsyncpa [#allocation4], 0
    %s10 = scalar_lea.sflag [#allocation4], 1
    %11 = vsyncpa %s10, 0
    %12 = vsyncpa [#allocation7], 0
    %s13 = scalar_lea.sflag [#allocation7], 1
    %14 = vsyncpa %s13, 0
    %15 = vsyncpa [#allocation5], 0
    %s16 = scalar_lea.sflag [#allocation5], 1
    %17 = vsyncpa %s16, 0
    loop: start=0, step=1, limit=4
    $region2: #{tpu_custom_call.1} parent=1 // loop_pre_header
      _
    $region3: #{tpu_custom_call.1} parent=1 // loop_header
      %s19 = sphi 0, %s23
      %p20 = scmp.ge.s32.totalorder %s19, 4
      %s29 = sphi 0, %s31
      %s32 = sphi 0, %s29
      %s33 = sphi 0, %s32
      %s49 = sphi 0, %s33
      %s55 = sphi 0, %s57
      %s58 = sphi 0, %s55
      %s59 = sphi 0, %s58
      %s75 = sphi 0, %s59
      %s79 = sphi 0, %s79
      %s81 = sphi 0, %s79
      %s82 = sphi 0, %s81
      %s96 = sphi 0, %s82
      %s100 = sphi 0, %s100
      %s102 = sphi 0, %s100
      %s103 = sphi 0, %s102
      %s117 = sphi 0, %s103
      %s123 = sphi 0, %s125
      %s126 = sphi 0, %s123
      %s127 = sphi 0, %s126
      %s143 = sphi 0, %s127
    $region4: #{tpu_custom_call.1} parent=1 // loop_header_branch
      %22 = sbr.rel (%p20) target = $region8
    $region5: #{tpu_custom_call.1} parent=1 // loop_body
      %s24 = ssub.s32 %s19, 1
      %s25 = ssub.s32 %s19, 2
      %s26 = sadd.s32 %s19, 1
      %s27 = ssub.s32 %s19, %s26
      %p28 = scmp.eq.s32.totalorder %s27, 0
      %s30 = sadd.s32 %s29, 1
      %s31 = scalar_select %p28, %s29, %s30
      %p34 = pneg %p28
      %p35 = scmp.eq.s32.totalorder %s19, 1
      %p36 = por %p34, %p35
      %p37 = scmp.ne.s32.totalorder %s29, %s32
      %p38 = scmp.eq.s32.totalorder %s19, 0
      %p39 = por %p37, %p38
      %p40 = scmp.ne.s32.totalorder %s29, %s32
      %p41 = scmp.eq.s32.totalorder %s24, 1
      %p42 = por %p40, %p41
      %p43 = scmp.ne.s32.totalorder %s32, %s33
      %p44 = scmp.eq.s32.totalorder %s24, 0
      %p45 = por %p43, %p44
      %p46 = scmp.ne.s32.totalorder %s32, %s33
      %p47 = scmp.eq.s32.totalorder %s25, 1
      %p48 = por %p46, %p47
      %p50 = scmp.ne.s32.totalorder %s33, %s49
      %p51 = scmp.eq.s32.totalorder %s25, 0
      %p52 = por %p50, %p51
      %s53 = ssub.s32 %s19, %s26
      %p54 = scmp.eq.s32.totalorder %s53, 0
      %s56 = sadd.s32 %s55, 1
      %s57 = scalar_select %p54, %s55, %s56
      %p60 = pneg %p54
      %p61 = scmp.eq.s32.totalorder %s19, 1
      %p62 = por %p60, %p61
      %p63 = scmp.ne.s32.totalorder %s55, %s58
      %p64 = scmp.eq.s32.totalorder %s19, 0
      %p65 = por %p63, %p64
      %p66 = scmp.ne.s32.totalorder %s55, %s58
      %p67 = scmp.eq.s32.totalorder %s24, 1
      %p68 = por %p66, %p67
      %p69 = scmp.ne.s32.totalorder %s58, %s59
      %p70 = scmp.eq.s32.totalorder %s24, 0
      %p71 = por %p69, %p70
      %p72 = scmp.ne.s32.totalorder %s58, %s59
      %p73 = scmp.eq.s32.totalorder %s25, 1
      %p74 = por %p72, %p73
      %p76 = scmp.ne.s32.totalorder %s59, %s75
      %p77 = scmp.eq.s32.totalorder %s25, 0
      %p78 = por %p76, %p77
      %s80 = sadd.s32 %s79, 1
      %p83 = scmp.eq.s32.totalorder %s19, 1
      %p84 = scmp.ne.s32.totalorder %s79, %s81
      %p85 = scmp.eq.s32.totalorder %s19, 0
      %p86 = por %p84, %p85
      %p87 = scmp.ne.s32.totalorder %s79, %s81
      %p88 = scmp.eq.s32.totalorder %s24, 1
      %p89 = por %p87, %p88
      %p90 = scmp.ne.s32.totalorder %s81, %s82
      %p91 = scmp.eq.s32.totalorder %s24, 0
      %p92 = por %p90, %p91
      %p93 = scmp.ne.s32.totalorder %s81, %s82
      %p94 = scmp.eq.s32.totalorder %s25, 1
      %p95 = por %p93, %p94
      %p97 = scmp.ne.s32.totalorder %s82, %s96
      %p98 = scmp.eq.s32.totalorder %s25, 0
      %p99 = por %p97, %p98
      %s101 = sadd.s32 %s100, 1
      %p104 = scmp.eq.s32.totalorder %s19, 1
      %p105 = scmp.ne.s32.totalorder %s100, %s102
      %p106 = scmp.eq.s32.totalorder %s19, 0
      %p107 = por %p105, %p106
      %p108 = scmp.ne.s32.totalorder %s100, %s102
      %p109 = scmp.eq.s32.totalorder %s24, 1
      %p110 = por %p108, %p109
      %p111 = scmp.ne.s32.totalorder %s102, %s103
      %p112 = scmp.eq.s32.totalorder %s24, 0
      %p113 = por %p111, %p112
      %p114 = scmp.ne.s32.totalorder %s102, %s103
      %p115 = scmp.eq.s32.totalorder %s25, 1
      %p116 = por %p114, %p115
      %p118 = scmp.ne.s32.totalorder %s103, %s117
      %p119 = scmp.eq.s32.totalorder %s25, 0
      %p120 = por %p118, %p119
      %s121 = ssub.s32 %s19, %s26
      %p122 = scmp.eq.s32.totalorder %s121, 0
      %s124 = sadd.s32 %s123, 1
      %s125 = scalar_select %p122, %s123, %s124
      %p128 = pneg %p122
      %p129 = scmp.eq.s32.totalorder %s19, 1
      %p130 = por %p128, %p129
      %p131 = scmp.ne.s32.totalorder %s123, %s126
      %p132 = scmp.eq.s32.totalorder %s19, 0
      %p133 = por %p131, %p132
      %p134 = scmp.ne.s32.totalorder %s123, %s126
      %p135 = scmp.eq.s32.totalorder %s24, 1
      %p136 = por %p134, %p135
      %p137 = scmp.ne.s32.totalorder %s126, %s127
      %p138 = scmp.eq.s32.totalorder %s24, 0
      %p139 = por %p137, %p138
      %p140 = scmp.ne.s32.totalorder %s126, %s127
      %p141 = scmp.eq.s32.totalorder %s25, 1
      %p142 = por %p140, %p141
      %p144 = scmp.ne.s32.totalorder %s127, %s143
      %p145 = scmp.eq.s32.totalorder %s25, 0
      %p146 = por %p144, %p145
      %p147 = scmp.le.s32.totalorder 1, %s19
      %p148 = scmp.lt.s32.totalorder %s19, 3
      %p149 = pnand %p147, %p148
      %p150 = pneg %p149
      // Predicated region
      $region9: #{tpu_custom_call.1} parent=5 // pred_check
        _
      $region10: #{tpu_custom_call.1} parent=5 // pred_check_branch
        %152 = sbr.rel (%p149) target = $region12
      $region11: #{tpu_custom_call.1} parent=5 // pred_region
        %s153 = ssub.s32 %s19, 1
        // Predicated region
        $region13: #{tpu_custom_call.1} parent=11 // pred_check
          %p154 = pneg %p92
        $region14: #{tpu_custom_call.1} parent=11 // pred_check_branch
          %156 = sbr.rel (%p154) target = $region16
        $region15: #{tpu_custom_call.1} parent=11 // pred_region
          %s158 = ssub.s32 7680, 7680
          %159 = vsyncadd [#allocation7], %s158
          %s160 = sshll.u32 [#allocation8], 4
          %s161 = int_to_ptr.vmem [resolvable:$true] %s160
          %166 = dma.hbm_to_vmem [thread:$0]  %s2, 7680, %s161, [#allocation7], 320, 320, 20
        $region16: #{tpu_custom_call.1} parent=11 // pred_fallthru
          _
        // Predicated region
        $region17: #{tpu_custom_call.1} parent=11 // pred_check
          %p167 = pneg %p113
        $region18: #{tpu_custom_call.1} parent=11 // pred_check_branch
          %169 = sbr.rel (%p167) target = $region20
        $region19: #{tpu_custom_call.1} parent=11 // pred_region
          _
        $region20: #{tpu_custom_call.1} parent=11 // pred_fallthru
          _
      $region12: #{tpu_custom_call.1} parent=5 // pred_fallthru
        _
      %p170 = scmp.lt.s32.totalorder %s19, 2
      // Predicated region
      $region21: #{tpu_custom_call.1} parent=5 // pred_check
        %p171 = pneg %p170
      $region22: #{tpu_custom_call.1} parent=5 // pred_check_branch
        %173 = sbr.rel (%p171) target = $region24
      $region23: #{tpu_custom_call.1} parent=5 // pred_region
        // Predicated region
        $region25: #{tpu_custom_call.1} parent=23 // pred_check
          %p174 = pneg %p39
        $region26: #{tpu_custom_call.1} parent=23 // pred_check_branch
          %176 = sbr.rel (%p174) target = $region28
        $region27: #{tpu_custom_call.1} parent=23 // pred_region
          %s177 = sand.u32 %s29, 1
          %s178 = scalar_lea.sflag [#allocation4], %s177
          %s179 = sand.u32 %s29, 1
          %s180 = smul.addr %s179, 32
          %s181 = scalar_lea.vmem [#allocation3], %s180
          %s183 = ssub.s32 512, 512
          %184 = vsyncadd %s178, %s183
          %s185 = smul.addr %s19, 4
          %s186 = smul.addr %s185, 128
          %s187 = scalar_lea.hbm %s0, %s186
          %s188 = sshll.u32 %s181, 4
          %s189 = int_to_ptr.vmem [resolvable:$true] %s188
          %194 = dma.hbm_to_vmem [thread:$0]  %s187, 512, %s189, %s178, 256, 256, 16
        $region28: #{tpu_custom_call.1} parent=23 // pred_fallthru
          _
        // Predicated region
        $region29: #{tpu_custom_call.1} parent=23 // pred_check
          %p195 = pneg %p65
        $region30: #{tpu_custom_call.1} parent=23 // pred_check_branch
          %197 = sbr.rel (%p195) target = $region32
        $region31: #{tpu_custom_call.1} parent=23 // pred_region
          %s198 = sand.u32 %s19, 1
          %s199 = scalar_lea.sflag [#allocation7], %s198
          %s200 = sand.u32 %s55, 1
          %s201 = scalar_lea.vmem [#allocation6], %s200
          %s203 = ssub.s32 16, 16
          %204 = vsyncadd %s199, %s203
          %s205 = smul.addr %s19, 16
          %s206 = scalar_lea.hbm %s1, %s205
          %s208 = sshll.u32 %s201, 4
          %s209 = int_to_ptr.vmem [resolvable:$true] %s208
          %211 = dma.hbm_to_vmem [thread:$0]  %s206, 16, %s209, %s199
        $region32: #{tpu_custom_call.1} parent=23 // pred_fallthru
          _
      $region24: #{tpu_custom_call.1} parent=5 // pred_fallthru
        _
      %p212 = scmp.le.s32.totalorder 1, %s19
      %p213 = scmp.lt.s32.totalorder %s19, 3
      %p214 = pnand %p212, %p213
      %p215 = pneg %p214
      // Predicated region
      $region33: #{tpu_custom_call.1} parent=5 // pred_check
        _
      $region34: #{tpu_custom_call.1} parent=5 // pred_check_branch
        %217 = sbr.rel (%p214) target = $region36
      $region35: #{tpu_custom_call.1} parent=5 // pred_region
        %s218 = ssub.s32 %s19, 1
        %s219 = sand.u32 %s32, 1
        %s220 = scalar_lea.sflag [#allocation4], %s219
        %s221 = sand.u32 %s32, 1
        %s222 = smul.addr %s221, 32
        %s223 = scalar_lea.vmem [#allocation3], %s222
        // Predicated region
        $region37: #{tpu_custom_call.1} parent=35 // pred_check
          %p224 = pneg %p45
        $region38: #{tpu_custom_call.1} parent=35 // pred_check_branch
          %226 = sbr.rel (%p224) target = $region40
        $region39: #{tpu_custom_call.1} parent=35 // pred_region
          %227 = dma.done %s220, 512
        $region40: #{tpu_custom_call.1} parent=35 // pred_fallthru
          _
        %s228 = sand.u32 %s24, 1
        %s229 = scalar_lea.sflag [#allocation7], %s228
        %s230 = sand.u32 %s58, 1
        %s231 = scalar_lea.vmem [#allocation6], %s230
        // Predicated region
        $region41: #{tpu_custom_call.1} parent=35 // pred_check
          %p232 = pneg %p71
        $region42: #{tpu_custom_call.1} parent=35 // pred_check_branch
          %234 = sbr.rel (%p232) target = $region44
        $region43: #{tpu_custom_call.1} parent=35 // pred_region
          %235 = dma.done %s229, 16
        $region44: #{tpu_custom_call.1} parent=35 // pred_fallthru
          _
        // Predicated region
        $region45: #{tpu_custom_call.1} parent=35 // pred_check
          %p236 = pneg %p92
        $region46: #{tpu_custom_call.1} parent=35 // pred_check_branch
          %238 = sbr.rel (%p236) target = $region48
        $region47: #{tpu_custom_call.1} parent=35 // pred_region
          %239 = dma.done [#allocation7], 7680
        $region48: #{tpu_custom_call.1} parent=35 // pred_fallthru
          _
        %s240 = sand.u32 %s32, 1
        %s241 = scalar_lea.sflag [#allocation4], %s240
        %s242 = sand.u32 %s32, 1
        %s243 = smul.addr %s242, 32
        %s244 = scalar_lea.vmem [#allocation3], %s243
        %p245 = pneg %p45
        %p246 = pneg %p42
        %s247 = sand.u32 %s24, 1
        %s248 = scalar_lea.sflag [#allocation7], %s247
        %s249 = sand.u32 %s58, 1
        %s250 = scalar_lea.vmem [#allocation6], %s249
        %p251 = pneg %p71
        %p252 = pneg %p68
        %p253 = pneg %p92
        %p254 = pneg %p89
        %p255 = pneg %p113
        %p256 = pneg %p110
        %p257 = pneg %p139
        %p258 = pneg %p136
        %s259 = sand.u32 %s126, 1
        %s260 = scalar_lea.sflag [#allocation5], %s259
        %s261 = sand.u32 %s126, 1
        %s262 = smul.addr %s261, 32
        %s263 = scalar_lea.vmem [#allocation9], %s262
        %v265 = vld [vmem:[%s223] sm:$0xff]
        %v266 = vld [vmem:[%s223 + $0x8] sm:$0xff]
        %v267 = vld [vmem:[%s223 + $0x10] sm:$0xff]
        %v268 = vld [vmem:[%s223 + $0x18] sm:$0xff]
        %v269 = vpack.c.bf16 %v267, %v265
        %v270 = vpack.c.bf16 %v268, %v266
        %v271 = vld [vmem:[#allocation8] sm:$0xff]
        %v272 = vld [vmem:[#allocation8 + $0x8] sm:$0xff]
        %v273 = vld [vmem:[#allocation8 + $0x10] sm:$0xf]
        %v274 = vld [vmem:[#allocation8 + $0x14] sm:$0xff]
        %v275 = vld [vmem:[#allocation8 + $0x1c] sm:$0xff]
        %v276 = vld [vmem:[#allocation8 + $0x24] sm:$0xf]
        %v277 = vld [vmem:[#allocation8 + $0x28] sm:$0xff]
        %v278 = vld [vmem:[#allocation8 + $0x30] sm:$0xff]
        %v279 = vld [vmem:[#allocation8 + $0x38] sm:$0xf]
        %v280 = vld [vmem:[#allocation8 + $0x3c] sm:$0xff]
        %v281 = vld [vmem:[#allocation8 + $0x44] sm:$0xff]
        %v282 = vld [vmem:[#allocation8 + $0x4c] sm:$0xf]
        %v283 = vld [vmem:[#allocation8 + $0x50] sm:$0xff]
        %v284 = vld [vmem:[#allocation8 + $0x58] sm:$0xff]
        %v285 = vld [vmem:[#allocation8 + $0x60] sm:$0xf]
        %v286 = vld [vmem:[#allocation8 + $0x64] sm:$0xff]
        %v287 = vld [vmem:[#allocation8 + $0x6c] sm:$0xff]
        %v288 = vld [vmem:[#allocation8 + $0x74] sm:$0xf]
        %v289 = vld [vmem:[#allocation8 + $0x78] sm:$0xff]
        %v290 = vld [vmem:[#allocation8 + $0x80] sm:$0xff]
        %v291 = vld [vmem:[#allocation8 + $0x88] sm:$0xf]
        %v292 = vld [vmem:[#allocation8 + $0x8c] sm:$0xff]
        %v293 = vld [vmem:[#allocation8 + $0x94] sm:$0xff]
        %v294 = vld [vmem:[#allocation8 + $0x9c] sm:$0xf]
        %v295 = vld [vmem:[#allocation8 + $0xa0] sm:$0xff]
        %v296 = vld [vmem:[#allocation8 + $0xa8] sm:$0xff]
        %v297 = vld [vmem:[#allocation8 + $0xb0] sm:$0xf]
        %v298 = vld [vmem:[#allocation8 + $0xb4] sm:$0xff]
        %v299 = vld [vmem:[#allocation8 + $0xbc] sm:$0xff]
        %v300 = vld [vmem:[#allocation8 + $0xc4] sm:$0xf]
        %v301 = vld [vmem:[#allocation8 + $0xc8] sm:$0xff]
        %v302 = vld [vmem:[#allocation8 + $0xd0] sm:$0xff]
        %v303 = vld [vmem:[#allocation8 + $0xd8] sm:$0xf]
        %v304 = vld [vmem:[#allocation8 + $0xdc] sm:$0xff]
        %v305 = vld [vmem:[#allocation8 + $0xe4] sm:$0xff]
        %v306 = vld [vmem:[#allocation8 + $0xec] sm:$0xf]
        %v307 = vld [vmem:[#allocation8 + $0xf0] sm:$0xff]
        %v308 = vld [vmem:[#allocation8 + $0xf8] sm:$0xff]
        %v309 = vld [vmem:[#allocation8 + $0x100] sm:$0xf]
        %v310 = vld [vmem:[#allocation8 + $0x104] sm:$0xff]
        %v311 = vld [vmem:[#allocation8 + $0x10c] sm:$0xff]
        %v312 = vld [vmem:[#allocation8 + $0x114] sm:$0xf]
        %v313 = vld [vmem:[#allocation8 + $0x118] sm:$0xff]
        %v314 = vld [vmem:[#allocation8 + $0x120] sm:$0xff]
        %v315 = vld [vmem:[#allocation8 + $0x128] sm:$0xf]
        %v316 = vld [vmem:[#allocation8 + $0x12c] sm:$0xff]
        %v317 = vld [vmem:[#allocation8 + $0x134] sm:$0xff]
        %v318 = vld [vmem:[#allocation8 + $0x13c] sm:$0xf]
        %v319 = vld [vmem:[#allocation8 + $0x140] sm:$0xff]
        %v320 = vld [vmem:[#allocation8 + $0x148] sm:$0xff]
        %v321 = vld [vmem:[#allocation8 + $0x150] sm:$0xf]
        %v322 = vld [vmem:[#allocation8 + $0x154] sm:$0xff]
        %v323 = vld [vmem:[#allocation8 + $0x15c] sm:$0xff]
        %v324 = vld [vmem:[#allocation8 + $0x164] sm:$0xf]
        %v325 = vld [vmem:[#allocation8 + $0x168] sm:$0xff]
        %v326 = vld [vmem:[#allocation8 + $0x170] sm:$0xff]
        %v327 = vld [vmem:[#allocation8 + $0x178] sm:$0xf]
        %v328 = vld [vmem:[#allocation8 + $0x17c] sm:$0xff]
        %v329 = vld [vmem:[#allocation8 + $0x184] sm:$0xff]
        %v330 = vld [vmem:[#allocation8 + $0x18c] sm:$0xf]
        %v331 = vld [vmem:[#allocation8 + $0x190] sm:$0xff]
        %v332 = vld [vmem:[#allocation8 + $0x198] sm:$0xff]
        %v333 = vld [vmem:[#allocation8 + $0x1a0] sm:$0xf]
        %v334 = vld [vmem:[#allocation8 + $0x1a4] sm:$0xff]
        %v335 = vld [vmem:[#allocation8 + $0x1ac] sm:$0xff]
        %v336 = vld [vmem:[#allocation8 + $0x1b4] sm:$0xf]
        %v337 = vld [vmem:[#allocation8 + $0x1b8] sm:$0xff]
        %v338 = vld [vmem:[#allocation8 + $0x1c0] sm:$0xff]
        %v339 = vld [vmem:[#allocation8 + $0x1c8] sm:$0xf]
        %v340 = vld [vmem:[#allocation8 + $0x1cc] sm:$0xff]
        %v341 = vld [vmem:[#allocation8 + $0x1d4] sm:$0xff]
        %v342 = vld [vmem:[#allocation8 + $0x1dc] sm:$0xf]
        %v343 = vld [vmem:[%s3] sm:$0x1f]
        %v345 = vlaneseq
        %v346 = vshrl.u32 %v345, 7
        %v347 = vsub.s32 0, %v346
        %v348 = vrot.slane %v343, %v347
        %v349 = vlaneseq
        %v350 = vshrl.u32 %v349, 7
        %v351 = vsub.s32 1, %v350
        %v352 = vrot.slane %v343, %v351
        %v353 = vlaneseq
        %v354 = vshrl.u32 %v353, 7
        %v355 = vsub.s32 2, %v354
        %v356 = vrot.slane %v343, %v355
        %v357 = vlaneseq
        %v358 = vshrl.u32 %v357, 7
        %v359 = vsub.s32 3, %v358
        %v360 = vrot.slane %v343, %v359
        %v361 = vlaneseq
        %v362 = vshrl.u32 %v361, 7
        %v363 = vsub.s32 4, %v362
        %v364 = vrot.slane %v343, %v363
        %v442 = vunpack.c.l.b16 %v271
        %v443 = vunpack.c.h.b16 %v271
        %v444 = vunpack.c.l.b16 %v272
        %v445 = vunpack.c.h.b16 %v272
        %v446 = vunpack.c.l.b16 %v273
        %v447 = vunpack.c.l.b16 %v274
        %v448 = vunpack.c.h.b16 %v274
        %v449 = vunpack.c.l.b16 %v275
        %v450 = vunpack.c.h.b16 %v275
        %v451 = vunpack.c.l.b16 %v276
        %v452 = vunpack.c.l.b16 %v277
        %v453 = vunpack.c.h.b16 %v277
        %v454 = vunpack.c.l.b16 %v278
        %v455 = vunpack.c.h.b16 %v278
        %v456 = vunpack.c.l.b16 %v279
        %v457 = vunpack.c.l.b16 %v280
        %v458 = vunpack.c.h.b16 %v280
        %v459 = vunpack.c.l.b16 %v281
        %v460 = vunpack.c.h.b16 %v281
        %v461 = vunpack.c.l.b16 %v282
        %v462 = vunpack.c.l.b16 %v283
        %v463 = vunpack.c.h.b16 %v283
        %v464 = vunpack.c.l.b16 %v284
        %v465 = vunpack.c.h.b16 %v284
        %v466 = vunpack.c.l.b16 %v285
        %v467 = vunpack.c.l.b16 %v286
        %v468 = vunpack.c.h.b16 %v286
        %v469 = vunpack.c.l.b16 %v287
        %v470 = vunpack.c.h.b16 %v287
        %v471 = vunpack.c.l.b16 %v288
        %v472 = vunpack.c.l.b16 %v289
        %v473 = vunpack.c.h.b16 %v289
        %v474 = vunpack.c.l.b16 %v290
        %v475 = vunpack.c.h.b16 %v290
        %v476 = vunpack.c.l.b16 %v291
        %v477 = vunpack.c.l.b16 %v292
        %v478 = vunpack.c.h.b16 %v292
        %v479 = vunpack.c.l.b16 %v293
        %v480 = vunpack.c.h.b16 %v293
        %v481 = vunpack.c.l.b16 %v294
        %v482 = vunpack.c.l.b16 %v295
        %v483 = vunpack.c.h.b16 %v295
        %v484 = vunpack.c.l.b16 %v296
        %v485 = vunpack.c.h.b16 %v296
        %v486 = vunpack.c.l.b16 %v297
        %v487 = vunpack.c.l.b16 %v298
        %v488 = vunpack.c.h.b16 %v298
        %v489 = vunpack.c.l.b16 %v299
        %v490 = vunpack.c.h.b16 %v299
        %v491 = vunpack.c.l.b16 %v300
        %v492 = vunpack.c.l.b16 %v301
        %v493 = vunpack.c.h.b16 %v301
        %v494 = vunpack.c.l.b16 %v302
        %v495 = vunpack.c.h.b16 %v302
        %v496 = vunpack.c.l.b16 %v303
        %v497 = vunpack.c.l.b16 %v304
        %v498 = vunpack.c.h.b16 %v304
        %v499 = vunpack.c.l.b16 %v305
        %v500 = vunpack.c.h.b16 %v305
        %v501 = vunpack.c.l.b16 %v306
        %v502 = vunpack.c.l.b16 %v307
        %v503 = vunpack.c.h.b16 %v307
        %v504 = vunpack.c.l.b16 %v308
        %v505 = vunpack.c.h.b16 %v308
        %v506 = vunpack.c.l.b16 %v309
        %v507 = vunpack.c.l.b16 %v310
        %v508 = vunpack.c.h.b16 %v310
        %v509 = vunpack.c.l.b16 %v311
        %v510 = vunpack.c.h.b16 %v311
        %v511 = vunpack.c.l.b16 %v312
        %v512 = vunpack.c.l.b16 %v313
        %v513 = vunpack.c.h.b16 %v313
        %v514 = vunpack.c.l.b16 %v314
        %v515 = vunpack.c.h.b16 %v314
        %v516 = vunpack.c.l.b16 %v315
        %v517 = vunpack.c.l.b16 %v316
        %v518 = vunpack.c.h.b16 %v316
        %v519 = vunpack.c.l.b16 %v317
        %v520 = vunpack.c.h.b16 %v317
        %v521 = vunpack.c.l.b16 %v318
        %v522 = vunpack.c.l.b16 %v319
        %v523 = vunpack.c.h.b16 %v319
        %v524 = vunpack.c.l.b16 %v320
        %v525 = vunpack.c.h.b16 %v320
        %v526 = vunpack.c.l.b16 %v321
        %v527 = vunpack.c.l.b16 %v322
        %v528 = vunpack.c.h.b16 %v322
        %v529 = vunpack.c.l.b16 %v323
        %v530 = vunpack.c.h.b16 %v323
        %v531 = vunpack.c.l.b16 %v324
        %v532 = vunpack.c.l.b16 %v325
        %v533 = vunpack.c.h.b16 %v325
        %v534 = vunpack.c.l.b16 %v326
        %v535 = vunpack.c.h.b16 %v326
        %v536 = vunpack.c.l.b16 %v327
        %v537 = vunpack.c.l.b16 %v328
        %v538 = vunpack.c.h.b16 %v328
        %v539 = vunpack.c.l.b16 %v329
        %v540 = vunpack.c.h.b16 %v329
        %v541 = vunpack.c.l.b16 %v330
        %v542 = vunpack.c.l.b16 %v331
        %v543 = vunpack.c.h.b16 %v331
        %v544 = vunpack.c.l.b16 %v332
        %v545 = vunpack.c.h.b16 %v332
        %v546 = vunpack.c.l.b16 %v333
        %v547 = vunpack.c.l.b16 %v334
        %v548 = vunpack.c.h.b16 %v334
        %v549 = vunpack.c.l.b16 %v335
        %v550 = vunpack.c.h.b16 %v335
        %v551 = vunpack.c.l.b16 %v336
        %v552 = vunpack.c.l.b16 %v337
        %v553 = vunpack.c.h.b16 %v337
        %v554 = vunpack.c.l.b16 %v338
        %v555 = vunpack.c.h.b16 %v338
        %v556 = vunpack.c.l.b16 %v339
        %v557 = vunpack.c.l.b16 %v340
        %v558 = vunpack.c.h.b16 %v340
        %v559 = vunpack.c.l.b16 %v341
        %v560 = vunpack.c.h.b16 %v341
        %v561 = vunpack.c.l.b16 %v342
        %v562 = vpack.c.b16 %v447, %v442
        %v563 = vpack.c.b16 %v448, %v443
        %v564 = vpack.c.b16 %v449, %v444
        %v565 = vpack.c.b16 %v450, %v445
        %v566 = vpack.c.b16 %v451, %v446
        %v567 = vpack.c.b16 %v457, %v452
        %v568 = vpack.c.b16 %v458, %v453
        %v569 = vpack.c.b16 %v459, %v454
        %v570 = vpack.c.b16 %v460, %v455
        %v571 = vpack.c.b16 %v461, %v456
        %v572 = vpack.c.b16 %v467, %v462
        %v573 = vpack.c.b16 %v468, %v463
        %v574 = vpack.c.b16 %v469, %v464
        %v575 = vpack.c.b16 %v470, %v465
        %v576 = vpack.c.b16 %v471, %v466
        %v577 = vpack.c.b16 %v477, %v472
        %v578 = vpack.c.b16 %v478, %v473
        %v579 = vpack.c.b16 %v479, %v474
        %v580 = vpack.c.b16 %v480, %v475
        %v581 = vpack.c.b16 %v481, %v476
        %v582 = vpack.c.b16 %v487, %v482
        %v583 = vpack.c.b16 %v488, %v483
        %v584 = vpack.c.b16 %v489, %v484
        %v585 = vpack.c.b16 %v490, %v485
        %v586 = vpack.c.b16 %v491, %v486
        %v587 = vpack.c.b16 %v497, %v492
        %v588 = vpack.c.b16 %v498, %v493
        %v589 = vpack.c.b16 %v499, %v494
        %v590 = vpack.c.b16 %v500, %v495
        %v591 = vpack.c.b16 %v501, %v496
        %v592 = vpack.c.b16 %v507, %v502
        %v593 = vpack.c.b16 %v508, %v503
        %v594 = vpack.c.b16 %v509, %v504
        %v595 = vpack.c.b16 %v510, %v505
        %v596 = vpack.c.b16 %v511, %v506
        %v597 = vpack.c.b16 %v517, %v512
        %v598 = vpack.c.b16 %v518, %v513
        %v599 = vpack.c.b16 %v519, %v514
        %v600 = vpack.c.b16 %v520, %v515
        %v601 = vpack.c.b16 %v521, %v516
        %v602 = vpack.c.b16 %v527, %v522
        %v603 = vpack.c.b16 %v528, %v523
        %v604 = vpack.c.b16 %v529, %v524
        %v605 = vpack.c.b16 %v530, %v525
        %v606 = vpack.c.b16 %v531, %v526
        %v607 = vpack.c.b16 %v537, %v532
        %v608 = vpack.c.b16 %v538, %v533
        %v609 = vpack.c.b16 %v539, %v534
        %v610 = vpack.c.b16 %v540, %v535
        %v611 = vpack.c.b16 %v541, %v536
        %v612 = vpack.c.b16 %v547, %v542
        %v613 = vpack.c.b16 %v548, %v543
        %v614 = vpack.c.b16 %v549, %v544
        %v615 = vpack.c.b16 %v550, %v545
        %v616 = vpack.c.b16 %v551, %v546
        %v617 = vpack.c.b16 %v557, %v552
        %v618 = vpack.c.b16 %v558, %v553
        %v619 = vpack.c.b16 %v559, %v554
        %v620 = vpack.c.b16 %v560, %v555
        %v621 = vpack.c.b16 %v561, %v556
        %vm682 = vcmask 523264
        %v684 = vsel %vm682, %v270, 0
        %686 = vmatprep.subr.bf16.mxu0 %v598
        %687 = vmatpush1.bf16.msra.mxu0 %v597
        %688 = vmatprep.subr.bf16.mxu0 %v593
        %689 = vmatpush1.bf16.msra.mxu0 %v592
        %690 = vmatprep.subr.bf16.mxu0 %v588
        %691 = vmatpush1.bf16.msra.mxu0 %v587
        %692 = vmatprep.subr.bf16.mxu0 %v583
        %693 = vmatpush1.bf16.msra.mxu0 %v582
        %694 = vmatprep.subr.bf16.mxu0 %v578
        %695 = vmatpush1.bf16.msra.mxu0 %v577
        %696 = vmatprep.subr.bf16.mxu0 %v573
        %697 = vmatpush1.bf16.msra.mxu0 %v572
        %698 = vmatprep.subr.bf16.mxu0 %v568
        %699 = vmatpush1.bf16.msra.mxu0 %v567
        %700 = vmatprep.subr.bf16.mxu0 %v563
        %701 = vmatpush1.bf16.msra.mxu0 %v562
        %702 = vmatprep.subr.bf16.mxu0 0
        %703 = vmatpush2.bf16.msra.mxu0 0
        %704 = vmatprep.subr.bf16.mxu0 0
        %705 = vmatpush2.bf16.msra.mxu0 0
        %706 = vmatprep.subr.bf16.mxu0 0
        %707 = vmatpush2.bf16.msra.mxu0 0
        %708 = vmatprep.subr.bf16.mxu0 0
        %709 = vmatpush2.bf16.msra.mxu0 0
        %710 = vmatprep.subr.bf16.mxu0 %v618
        %711 = vmatpush2.bf16.msra.mxu0 %v617
        %712 = vmatprep.subr.bf16.mxu0 %v613
        %713 = vmatpush2.bf16.msra.mxu0 %v612
        %714 = vmatprep.subr.bf16.mxu0 %v608
        %715 = vmatpush2.bf16.msra.mxu0 %v607
        %716 = vmatprep.subr.bf16.mxu0 %v603
        %717 = vmatpush2.bf16.msra.mxu0 %v602
        %718 = vmatprep.mubr.bf16.mxu0 %v684
        %719 = vmatmul.mubr.bf16.gmra.mxu0 %v269
        %v720 = vpop.f32.mrf.mxu0
        %v721 = vadd.f32 %v348, %v720
        %v722 = vpop.f32.mrf.mxu0
        %v723 = vadd.f32 %v352, %v722
        %v724 = vpop.f32.mrf.mxu0
        %v725 = vadd.f32 %v348, %v724
        %v726 = vpop.f32.mrf.mxu0
        %v727 = vadd.f32 %v352, %v726
        %728 = vdwg.mxu0
        %729 = vmatprep.subr.bf16.mxu0 %v600
        %730 = vmatpush1.bf16.msra.mxu0 %v599
        %731 = vmatprep.subr.bf16.mxu0 %v595
        %732 = vmatpush1.bf16.msra.mxu0 %v594
        %733 = vmatprep.subr.bf16.mxu0 %v590
        %734 = vmatpush1.bf16.msra.mxu0 %v589
        %735 = vmatprep.subr.bf16.mxu0 %v585
        %736 = vmatpush1.bf16.msra.mxu0 %v584
        %737 = vmatprep.subr.bf16.mxu0 %v580
        %738 = vmatpush1.bf16.msra.mxu0 %v579
        %739 = vmatprep.subr.bf16.mxu0 %v575
        %740 = vmatpush1.bf16.msra.mxu0 %v574
        %741 = vmatprep.subr.bf16.mxu0 %v570
        %742 = vmatpush1.bf16.msra.mxu0 %v569
        %743 = vmatprep.subr.bf16.mxu0 %v565
        %744 = vmatpush1.bf16.msra.mxu0 %v564
        %745 = vmatprep.subr.bf16.mxu0 0
        %746 = vmatpush2.bf16.msra.mxu0 0
        %747 = vmatprep.subr.bf16.mxu0 0
        %748 = vmatpush2.bf16.msra.mxu0 0
        %749 = vmatprep.subr.bf16.mxu0 0
        %750 = vmatpush2.bf16.msra.mxu0 0
        %751 = vmatprep.subr.bf16.mxu0 0
        %752 = vmatpush2.bf16.msra.mxu0 0
        %753 = vmatprep.subr.bf16.mxu0 %v620
        %754 = vmatpush2.bf16.msra.mxu0 %v619
        %755 = vmatprep.subr.bf16.mxu0 %v615
        %756 = vmatpush2.bf16.msra.mxu0 %v614
        %757 = vmatprep.subr.bf16.mxu0 %v610
        %758 = vmatpush2.bf16.msra.mxu0 %v609
        %759 = vmatprep.subr.bf16.mxu0 %v605
        %760 = vmatpush2.bf16.msra.mxu0 %v604
        %761 = vmatprep.mubr.bf16.mxu0 %v684
        %762 = vmatmul.mubr.bf16.gmra.mxu0 %v269
        %v763 = vpop.f32.mrf.mxu0
        %v764 = vadd.f32 %v356, %v763
        %v765 = vpop.f32.mrf.mxu0
        %v766 = vadd.f32 %v360, %v765
        %v767 = vpop.f32.mrf.mxu0
        %v768 = vadd.f32 %v356, %v767
        %v769 = vpop.f32.mrf.mxu0
        %v770 = vadd.f32 %v360, %v769
        %771 = vdwg.mxu0
        %772 = vmatprep.subr.bf16.mxu0 0
        %773 = vmatpush1.bf16.msra.mxu0 %v601
        %774 = vmatprep.subr.bf16.mxu0 0
        %775 = vmatpush1.bf16.msra.mxu0 %v596
        %776 = vmatprep.subr.bf16.mxu0 0
        %777 = vmatpush1.bf16.msra.mxu0 %v591
        %778 = vmatprep.subr.bf16.mxu0 0
        %779 = vmatpush1.bf16.msra.mxu0 %v586
        %780 = vmatprep.subr.bf16.mxu0 0
        %781 = vmatpush1.bf16.msra.mxu0 %v581
        %782 = vmatprep.subr.bf16.mxu0 0
        %783 = vmatpush1.bf16.msra.mxu0 %v576
        %784 = vmatprep.subr.bf16.mxu0 0
        %785 = vmatpush1.bf16.msra.mxu0 %v571
        %786 = vmatprep.subr.bf16.mxu0 0
        %787 = vmatpush1.bf16.msra.mxu0 %v566
        %788 = vmatprep.subr.bf16.mxu0 0
        %789 = vmatpush2.bf16.msra.mxu0 0
        %790 = vmatprep.subr.bf16.mxu0 0
        %791 = vmatpush2.bf16.msra.mxu0 0
        %792 = vmatprep.subr.bf16.mxu0 0
        %793 = vmatpush2.bf16.msra.mxu0 0
        %794 = vmatprep.subr.bf16.mxu0 0
        %795 = vmatpush2.bf16.msra.mxu0 0
        %796 = vmatprep.subr.bf16.mxu0 0
        %797 = vmatpush2.bf16.msra.mxu0 %v621
        %798 = vmatprep.subr.bf16.mxu0 0
        %799 = vmatpush2.bf16.msra.mxu0 %v616
        %800 = vmatprep.subr.bf16.mxu0 0
        %801 = vmatpush2.bf16.msra.mxu0 %v611
        %802 = vmatprep.subr.bf16.mxu0 0
        %803 = vmatpush2.bf16.msra.mxu0 %v606
        %804 = vmatprep.mubr.bf16.mxu0 %v684
        %805 = vmatmul.mubr.bf16.gmra.mxu0 %v269
        %v806 = vpop.f32.mrf.mxu0
        %v807 = vadd.f32 %v364, %v806
        %v808 = vpop.f32.mrf.mxu0
        %v809 = vpop.f32.mrf.mxu0
        %v810 = vadd.f32 %v364, %v809
        %v811 = vpop.f32.mrf.mxu0
        %812 = vdwg.mxu0
        %v813 = vld [vmem:[%s231] sm:$0x1]
        %v814 = vpack.c.bf16 %v725, %v721
        %v815 = vpack.c.bf16 %v727, %v723
        %v816 = vpack.c.bf16 %v770, %v766
        %818 = vrot.lane.b32.xlu0 %v815, 64
        %v819 = vpop.permute.xlu0 %818
        %vm820 = vcmask 130048
        %v822 = vsel %vm820, %v814, 0
        %v825 = vsel %vm820, %v819, 0
        %827 = vmatprep.subr.bf16.mxu0 0
        %828 = vmatpush1.bf16.xpose.msra.mxu0 0
        %829 = vmatprep.subr.bf16.mxu0 0
        %830 = vmatpush1.bf16.xpose.msra.mxu0 0
        %831 = vmatprep.subr.bf16.mxu0 0
        %832 = vmatpush1.bf16.xpose.msra.mxu0 0
        %833 = vmatprep.subr.bf16.mxu0 0
        %834 = vmatpush1.bf16.xpose.msra.mxu0 0
        %835 = vmatprep.subr.bf16.mxu0 0
        %836 = vmatpush1.bf16.xpose.msra.mxu0 0
        %837 = vmatprep.subr.bf16.mxu0 0
        %838 = vmatpush1.bf16.xpose.msra.mxu0 0
        %839 = vmatprep.subr.bf16.mxu0 0
        %840 = vmatpush1.bf16.xpose.msra.mxu0 0
        %841 = vmatprep.subr.bf16.mxu0 0
        %842 = vmatpush1.bf16.xpose.msra.mxu0 %v825
        %843 = vmatprep.subr.bf16.mxu0 0
        %844 = vmatpush2.bf16.xpose.msra.mxu0 0
        %845 = vmatprep.subr.bf16.mxu0 0
        %846 = vmatpush2.bf16.xpose.msra.mxu0 0
        %847 = vmatprep.subr.bf16.mxu0 0
        %848 = vmatpush2.bf16.xpose.msra.mxu0 0
        %849 = vmatprep.subr.bf16.mxu0 0
        %850 = vmatpush2.bf16.xpose.msra.mxu0 0
        %851 = vmatprep.subr.bf16.mxu0 0
        %852 = vmatpush2.bf16.xpose.msra.mxu0 0
        %853 = vmatprep.subr.bf16.mxu0 0
        %854 = vmatpush2.bf16.xpose.msra.mxu0 0
        %855 = vmatprep.subr.bf16.mxu0 0
        %856 = vmatpush2.bf16.xpose.msra.mxu0 0
        %857 = vmatprep.subr.bf16.mxu0 0
        %858 = vmatpush2.bf16.xpose.msra.mxu0 0
        %859 = vmatprep.mubr.bf16.mxu0 0
        %860 = vmatmul.mubr.bf16.gmra.mxu0 %v822
        %v861 = vpop.f32.mrf.mxu0
        %v862 = vadd.f32 0.0, %v861
        %v863 = vpop.f32.mrf.mxu0
        %v864 = vpop.f32.mrf.mxu0
        %v865 = vadd.f32 0.0, %v864
        %v866 = vpop.f32.mrf.mxu0
        %867 = vdwg.mxu0
        %v868 = vmul.f32 %v862, 0.25
        %v869 = vmul.f32 %v865, 0.25
        %v871 = vlaneseq
        %v872 = vshrl.u32 %v871, 7
        %v873 = vsub.s32 0, %v872
        %v874 = vrot.slane %v813, %v873
        %v876 = vadd.f32 %v868, %v874
        %v877 = vadd.f32 %v869, %v874
        %v878 = vsel %vm820, %v876, -inf
        %879 = vmax.xlane.f32.xlu0 %v878
        %v880 = vpop.xlane.xlu0 %879
        %v881 = vsel %vm820, %v877, -inf
        %882 = vmax.xlane.f32.xlu0 %v881
        %v883 = vpop.xlane.xlu0 %882
        %v884 = vsub.f32 %v876, %v880
        %v885 = vsub.f32 %v877, %v883
        %v886 = vmul.f32 %v884, 1.442695
        %v887 = vpow.pop %v886
        %v888 = vmul.f32 %v885, 1.442695
        %v889 = vpow.pop %v888
        %v890 = vsel %vm820, %v887, 0.0
        %891 = vadd.xlane.f32.xlu0 %v890
        %v892 = vpop.xlane.xlu0 %891
        %v893 = vsel %vm820, %v889, 0.0
        %894 = vadd.xlane.f32.xlu0 %v893
        %v895 = vpop.xlane.xlu0 %894
        %v896 = vrcp.pop %v892
        %v897 = vrcp.pop %v895
        %v898 = vmul.f32 %v887, %v896
        %v899 = vmul.f32 %v889, %v897
        %v900 = vpack.c.bf16 %v899, %v898
        %v902 = vsel %vm820, %v900, 0
        %904 = vmatprep.subr.bf16.mxu0 0
        %905 = vmatpush1.bf16.msra.mxu0 0
        %906 = vmatprep.subr.bf16.mxu0 0
        %907 = vmatpush1.bf16.msra.mxu0 0
        %908 = vmatprep.subr.bf16.mxu0 0
        %909 = vmatpush1.bf16.msra.mxu0 0
        %910 = vmatprep.subr.bf16.mxu0 0
        %911 = vmatpush1.bf16.msra.mxu0 0
        %912 = vmatprep.subr.bf16.mxu0 0
        %913 = vmatpush1.bf16.msra.mxu0 0
        %914 = vmatprep.subr.bf16.mxu0 0
        %915 = vmatpush1.bf16.msra.mxu0 0
        %916 = vmatprep.subr.bf16.mxu0 0
        %917 = vmatpush1.bf16.msra.mxu0 0
        %918 = vmatprep.subr.bf16.mxu0 0
        %919 = vmatpush1.bf16.msra.mxu0 %v816
        %920 = vmatprep.subr.bf16.mxu0 0
        %921 = vmatpush2.bf16.msra.mxu0 0
        %922 = vmatprep.subr.bf16.mxu0 0
        %923 = vmatpush2.bf16.msra.mxu0 0
        %924 = vmatprep.subr.bf16.mxu0 0
        %925 = vmatpush2.bf16.msra.mxu0 0
        %926 = vmatprep.subr.bf16.mxu0 0
        %927 = vmatpush2.bf16.msra.mxu0 0
        %928 = vmatprep.subr.bf16.mxu0 0
        %929 = vmatpush2.bf16.msra.mxu0 0
        %930 = vmatprep.subr.bf16.mxu0 0
        %931 = vmatpush2.bf16.msra.mxu0 0
        %932 = vmatprep.subr.bf16.mxu0 0
        %933 = vmatpush2.bf16.msra.mxu0 0
        %934 = vmatprep.subr.bf16.mxu0 0
        %935 = vmatpush2.bf16.msra.mxu0 0
        %936 = vmatprep.mubr.bf16.mxu0 0
        %937 = vmatmul.mubr.bf16.gmra.mxu0 %v902
        %v938 = vpop.f32.mrf.mxu0
        %v939 = vadd.f32 0.0, %v938
        %v940 = vpop.f32.mrf.mxu0
        %v941 = vpop.f32.mrf.mxu0
        %v942 = vadd.f32 0.0, %v941
        %v943 = vpop.f32.mrf.mxu0
        %944 = vdwg.mxu0
        %945 = vst.msk [vmem:[#allocation2] sm:$0xff] %vm820, %v939
        %946 = vst.msk [vmem:[#allocation2 + $0x10] sm:$0xff] %vm820, %v942
        %948 = vrot.lane.b32.xlu0 %v814, 112
        %v949 = vpop.permute.xlu0 %948
        %950 = vrot.lane.b32.xlu0 %v815, 48
        %v951 = vpop.permute.xlu0 %950
        %v953 = vsel %vm820, %v949, 0
        %v956 = vsel %vm820, %v951, 0
        %958 = vmatprep.subr.bf16.mxu0 0
        %959 = vmatpush1.bf16.xpose.msra.mxu0 0
        %960 = vmatprep.subr.bf16.mxu0 0
        %961 = vmatpush1.bf16.xpose.msra.mxu0 0
        %962 = vmatprep.subr.bf16.mxu0 0
        %963 = vmatpush1.bf16.xpose.msra.mxu0 0
        %964 = vmatprep.subr.bf16.mxu0 0
        %965 = vmatpush1.bf16.xpose.msra.mxu0 0
        %966 = vmatprep.subr.bf16.mxu0 0
        %967 = vmatpush1.bf16.xpose.msra.mxu0 0
        %968 = vmatprep.subr.bf16.mxu0 0
        %969 = vmatpush1.bf16.xpose.msra.mxu0 0
        %970 = vmatprep.subr.bf16.mxu0 0
        %971 = vmatpush1.bf16.xpose.msra.mxu0 0
        %972 = vmatprep.subr.bf16.mxu0 0
        %973 = vmatpush1.bf16.xpose.msra.mxu0 %v956
        %974 = vmatprep.subr.bf16.mxu0 0
        %975 = vmatpush2.bf16.xpose.msra.mxu0 0
        %976 = vmatprep.subr.bf16.mxu0 0
        %977 = vmatpush2.bf16.xpose.msra.mxu0 0
        %978 = vmatprep.subr.bf16.mxu0 0
        %979 = vmatpush2.bf16.xpose.msra.mxu0 0
        %980 = vmatprep.subr.bf16.mxu0 0
        %981 = vmatpush2.bf16.xpose.msra.mxu0 0
        %982 = vmatprep.subr.bf16.mxu0 0
        %983 = vmatpush2.bf16.xpose.msra.mxu0 0
        %984 = vmatprep.subr.bf16.mxu0 0
        %985 = vmatpush2.bf16.xpose.msra.mxu0 0
        %986 = vmatprep.subr.bf16.mxu0 0
        %987 = vmatpush2.bf16.xpose.msra.mxu0 0
        %988 = vmatprep.subr.bf16.mxu0 0
        %989 = vmatpush2.bf16.xpose.msra.mxu0 0
        %990 = vmatprep.mubr.bf16.mxu0 0
        %991 = vmatmul.mubr.bf16.gmra.mxu0 %v953
        %v992 = vpop.f32.mrf.mxu0
        %v993 = vadd.f32 0.0, %v992
        %v994 = vpop.f32.mrf.mxu0
        %v995 = vpop.f32.mrf.mxu0
        %v996 = vadd.f32 0.0, %v995
        %v997 = vpop.f32.mrf.mxu0
        %998 = vdwg.mxu0
        %v999 = vmul.f32 %v993, 0.25
        %v1000 = vmul.f32 %v996, 0.25
        %v1001 = vadd.f32 %v999, %v874
        %v1002 = vadd.f32 %v1000, %v874
        %v1003 = vsel %vm820, %v1001, -inf
        %1004 = vmax.xlane.f32.xlu0 %v1003
        %v1005 = vpop.xlane.xlu0 %1004
        %v1006 = vsel %vm820, %v1002, -inf
        %1007 = vmax.xlane.f32.xlu0 %v1006
        %v1008 = vpop.xlane.xlu0 %1007
        %v1009 = vsub.f32 %v1001, %v1005
        %v1010 = vsub.f32 %v1002, %v1008
        %v1011 = vmul.f32 %v1009, 1.442695
        %v1012 = vpow.pop %v1011
        %v1013 = vmul.f32 %v1010, 1.442695
        %v1014 = vpow.pop %v1013
        %v1015 = vsel %vm820, %v1012, 0.0
        %1016 = vadd.xlane.f32.xlu0 %v1015
        %v1017 = vpop.xlane.xlu0 %1016
        %v1018 = vsel %vm820, %v1014, 0.0
        %1019 = vadd.xlane.f32.xlu0 %v1018
        %v1020 = vpop.xlane.xlu0 %1019
        %v1021 = vrcp.pop %v1017
        %v1022 = vrcp.pop %v1020
        %v1023 = vmul.f32 %v1012, %v1021
        %v1024 = vmul.f32 %v1014, %v1022
        %v1025 = vpack.c.bf16 %v1024, %v1023
        %1027 = vrot.lane.b32.xlu0 %v816, 112
        %v1028 = vpop.permute.xlu0 %1027
        %v1031 = vsel %vm820, %v1025, 0
        %1033 = vmatprep.subr.bf16.mxu0 0
        %1034 = vmatpush1.bf16.msra.mxu0 0
        %1035 = vmatprep.subr.bf16.mxu0 0
        %1036 = vmatpush1.bf16.msra.mxu0 0
        %1037 = vmatprep.subr.bf16.mxu0 0
        %1038 = vmatpush1.bf16.msra.mxu0 0
        %1039 = vmatprep.subr.bf16.mxu0 0
        %1040 = vmatpush1.bf16.msra.mxu0 0
        %1041 = vmatprep.subr.bf16.mxu0 0
        %1042 = vmatpush1.bf16.msra.mxu0 0
        %1043 = vmatprep.subr.bf16.mxu0 0
        %1044 = vmatpush1.bf16.msra.mxu0 0
        %1045 = vmatprep.subr.bf16.mxu0 0
        %1046 = vmatpush1.bf16.msra.mxu0 0
        %1047 = vmatprep.subr.bf16.mxu0 0
        %1048 = vmatpush1.bf16.msra.mxu0 %v1028
        %1049 = vmatprep.subr.bf16.mxu0 0
        %1050 = vmatpush2.bf16.msra.mxu0 0
        %1051 = vmatprep.subr.bf16.mxu0 0
        %1052 = vmatpush2.bf16.msra.mxu0 0
        %1053 = vmatprep.subr.bf16.mxu0 0
        %1054 = vmatpush2.bf16.msra.mxu0 0
        %1055 = vmatprep.subr.bf16.mxu0 0
        %1056 = vmatpush2.bf16.msra.mxu0 0
        %1057 = vmatprep.subr.bf16.mxu0 0
        %1058 = vmatpush2.bf16.msra.mxu0 0
        %1059 = vmatprep.subr.bf16.mxu0 0
        %1060 = vmatpush2.bf16.msra.mxu0 0
        %1061 = vmatprep.subr.bf16.mxu0 0
        %1062 = vmatpush2.bf16.msra.mxu0 0
        %1063 = vmatprep.subr.bf16.mxu0 0
        %1064 = vmatpush2.bf16.msra.mxu0 0
        %1065 = vmatprep.mubr.bf16.mxu0 0
        %1066 = vmatmul.mubr.bf16.gmra.mxu0 %v1031
        %v1067 = vpop.f32.mrf.mxu0
        %v1068 = vadd.f32 0.0, %v1067
        %v1069 = vpop.f32.mrf.mxu0
        %v1070 = vpop.f32.mrf.mxu0
        %v1071 = vadd.f32 0.0, %v1070
        %v1072 = vpop.f32.mrf.mxu0
        %1073 = vdwg.mxu0
        %1076 = vrot.lane.b32.xlu0 %v1068, 16
        %v1077 = vpop.permute.xlu0 %1076
        %1078 = vrot.lane.b32.xlu0 %v1071, 16
        %v1079 = vpop.permute.xlu0 %1078
        %vm1082 = vcmask 261248
        %1083 = vst.msk [vmem:[#allocation2] sm:$0xff] %vm1082, %v1077
        %1084 = vst.msk [vmem:[#allocation2 + $0x10] sm:$0xff] %vm1082, %v1079
        %1085 = vrot.lane.b32.xlu0 %v814, 96
        %v1086 = vpop.permute.xlu0 %1085
        %1087 = vrot.lane.b32.xlu0 %v815, 32
        %v1088 = vpop.permute.xlu0 %1087
        %v1090 = vsel %vm820, %v1086, 0
        %v1093 = vsel %vm820, %v1088, 0
        %1095 = vmatprep.subr.bf16.mxu0 0
        %1096 = vmatpush1.bf16.xpose.msra.mxu0 0
        %1097 = vmatprep.subr.bf16.mxu0 0
        %1098 = vmatpush1.bf16.xpose.msra.mxu0 0
        %1099 = vmatprep.subr.bf16.mxu0 0
        %1100 = vmatpush1.bf16.xpose.msra.mxu0 0
        %1101 = vmatprep.subr.bf16.mxu0 0
        %1102 = vmatpush1.bf16.xpose.msra.mxu0 0
        %1103 = vmatprep.subr.bf16.mxu0 0
        %1104 = vmatpush1.bf16.xpose.msra.mxu0 0
        %1105 = vmatprep.subr.bf16.mxu0 0
        %1106 = vmatpush1.bf16.xpose.msra.mxu0 0
        %1107 = vmatprep.subr.bf16.mxu0 0
        %1108 = vmatpush1.bf16.xpose.msra.mxu0 0
        %1109 = vmatprep.subr.bf16.mxu0 0
        %1110 = vmatpush1.bf16.xpose.msra.mxu0 %v1093
        %1111 = vmatprep.subr.bf16.mxu0 0
        %1112 = vmatpush2.bf16.xpose.msra.mxu0 0
        %1113 = vmatprep.subr.bf16.mxu0 0
        %1114 = vmatpush2.bf16.xpose.msra.mxu0 0
        %1115 = vmatprep.subr.bf16.mxu0 0
        %1116 = vmatpush2.bf16.xpose.msra.mxu0 0
        %1117 = vmatprep.subr.bf16.mxu0 0
        %1118 = vmatpush2.bf16.xpose.msra.mxu0 0
        %1119 = vmatprep.subr.bf16.mxu0 0
        %1120 = vmatpush2.bf16.xpose.msra.mxu0 0
        %1121 = vmatprep.subr.bf16.mxu0 0
        %1122 = vmatpush2.bf16.xpose.msra.mxu0 0
        %1123 = vmatprep.subr.bf16.mxu0 0
        %1124 = vmatpush2.bf16.xpose.msra.mxu0 0
        %1125 = vmatprep.subr.bf16.mxu0 0
        %1126 = vmatpush2.bf16.xpose.msra.mxu0 0
        %1127 = vmatprep.mubr.bf16.mxu0 0
        %1128 = vmatmul.mubr.bf16.gmra.mxu0 %v1090
        %v1129 = vpop.f32.mrf.mxu0
        %v1130 = vadd.f32 0.0, %v1129
        %v1131 = vpop.f32.mrf.mxu0
        %v1132 = vpop.f32.mrf.mxu0
        %v1133 = vadd.f32 0.0, %v1132
        %v1134 = vpop.f32.mrf.mxu0
        %1135 = vdwg.mxu0
        %v1136 = vmul.f32 %v1130, 0.25
        %v1137 = vmul.f32 %v1133, 0.25
        %v1138 = vadd.f32 %v1136, %v874
        %v1139 = vadd.f32 %v1137, %v874
        %v1140 = vsel %vm820, %v1138, -inf
        %1141 = vmax.xlane.f32.xlu0 %v1140
        %v1142 = vpop.xlane.xlu0 %1141
        %v1143 = vsel %vm820, %v1139, -inf
        %1144 = vmax.xlane.f32.xlu0 %v1143
        %v1145 = vpop.xlane.xlu0 %1144
        %v1146 = vsub.f32 %v1138, %v1142
        %v1147 = vsub.f32 %v1139, %v1145
        %v1148 = vmul.f32 %v1146, 1.442695
        %v1149 = vpow.pop %v1148
        %v1150 = vmul.f32 %v1147, 1.442695
        %v1151 = vpow.pop %v1150
        %v1152 = vsel %vm820, %v1149, 0.0
        %1153 = vadd.xlane.f32.xlu0 %v1152
        %v1154 = vpop.xlane.xlu0 %1153
        %v1155 = vsel %vm820, %v1151, 0.0
        %1156 = vadd.xlane.f32.xlu0 %v1155
        %v1157 = vpop.xlane.xlu0 %1156
        %v1158 = vrcp.pop %v1154
        %v1159 = vrcp.pop %v1157
        %v1160 = vmul.f32 %v1149, %v1158
        %v1161 = vmul.f32 %v1151, %v1159
        %v1162 = vpack.c.bf16 %v1161, %v1160
        %1163 = vrot.lane.b32.xlu0 %v816, 96
        %v1164 = vpop.permute.xlu0 %1163
        %v1167 = vsel %vm820, %v1162, 0
        %1169 = vmatprep.subr.bf16.mxu0 0
        %1170 = vmatpush1.bf16.msra.mxu0 0
        %1171 = vmatprep.subr.bf16.mxu0 0
        %1172 = vmatpush1.bf16.msra.mxu0 0
        %1173 = vmatprep.subr.bf16.mxu0 0
        %1174 = vmatpush1.bf16.msra.mxu0 0
        %1175 = vmatprep.subr.bf16.mxu0 0
        %1176 = vmatpush1.bf16.msra.mxu0 0
        %1177 = vmatprep.subr.bf16.mxu0 0
        %1178 = vmatpush1.bf16.msra.mxu0 0
        %1179 = vmatprep.subr.bf16.mxu0 0
        %1180 = vmatpush1.bf16.msra.mxu0 0
        %1181 = vmatprep.subr.bf16.mxu0 0
        %1182 = vmatpush1.bf16.msra.mxu0 0
        %1183 = vmatprep.subr.bf16.mxu0 0
        %1184 = vmatpush1.bf16.msra.mxu0 %v1164
        %1185 = vmatprep.subr.bf16.mxu0 0
        %1186 = vmatpush2.bf16.msra.mxu0 0
        %1187 = vmatprep.subr.bf16.mxu0 0
        %1188 = vmatpush2.bf16.msra.mxu0 0
        %1189 = vmatprep.subr.bf16.mxu0 0
        %1190 = vmatpush2.bf16.msra.mxu0 0
        %1191 = vmatprep.subr.bf16.mxu0 0
        %1192 = vmatpush2.bf16.msra.mxu0 0
        %1193 = vmatprep.subr.bf16.mxu0 0
        %1194 = vmatpush2.bf16.msra.mxu0 0
        %1195 = vmatprep.subr.bf16.mxu0 0
        %1196 = vmatpush2.bf16.msra.mxu0 0
        %1197 = vmatprep.subr.bf16.mxu0 0
        %1198 = vmatpush2.bf16.msra.mxu0 0
        %1199 = vmatprep.subr.bf16.mxu0 0
        %1200 = vmatpush2.bf16.msra.mxu0 0
        %1201 = vmatprep.mubr.bf16.mxu0 0
        %1202 = vmatmul.mubr.bf16.gmra.mxu0 %v1167
        %v1203 = vpop.f32.mrf.mxu0
        %v1204 = vadd.f32 0.0, %v1203
        %v1205 = vpop.f32.mrf.mxu0
        %v1206 = vpop.f32.mrf.mxu0
        %v1207 = vadd.f32 0.0, %v1206
        %v1208 = vpop.f32.mrf.mxu0
        %1209 = vdwg.mxu0
        %1212 = vrot.lane.b32.xlu0 %v1204, 32
        %v1213 = vpop.permute.xlu0 %1212
        %1214 = vrot.lane.b32.xlu0 %v1207, 32
        %v1215 = vpop.permute.xlu0 %1214
        %vm1218 = vcmask 392448
        %1219 = vst.msk [vmem:[#allocation2] sm:$0xff] %vm1218, %v1213
        %1220 = vst.msk [vmem:[#allocation2 + $0x10] sm:$0xff] %vm1218, %v1215
        %1221 = vrot.lane.b32.xlu0 %v814, 80
        %v1222 = vpop.permute.xlu0 %1221
        %1223 = vrot.lane.b32.xlu0 %v815, 16
        %v1224 = vpop.permute.xlu0 %1223
        %v1226 = vsel %vm820, %v1222, 0
        %v1229 = vsel %vm820, %v1224, 0
        %1231 = vmatprep.subr.bf16.mxu0 0
        %1232 = vmatpush1.bf16.xpose.msra.mxu0 0
        %1233 = vmatprep.subr.bf16.mxu0 0
        %1234 = vmatpush1.bf16.xpose.msra.mxu0 0
        %1235 = vmatprep.subr.bf16.mxu0 0
        %1236 = vmatpush1.bf16.xpose.msra.mxu0 0
        %1237 = vmatprep.subr.bf16.mxu0 0
        %1238 = vmatpush1.bf16.xpose.msra.mxu0 0
        %1239 = vmatprep.subr.bf16.mxu0 0
        %1240 = vmatpush1.bf16.xpose.msra.mxu0 0
        %1241 = vmatprep.subr.bf16.mxu0 0
        %1242 = vmatpush1.bf16.xpose.msra.mxu0 0
        %1243 = vmatprep.subr.bf16.mxu0 0
        %1244 = vmatpush1.bf16.xpose.msra.mxu0 0
        %1245 = vmatprep.subr.bf16.mxu0 0
        %1246 = vmatpush1.bf16.xpose.msra.mxu0 %v1229
        %1247 = vmatprep.subr.bf16.mxu0 0
        %1248 = vmatpush2.bf16.xpose.msra.mxu0 0
        %1249 = vmatprep.subr.bf16.mxu0 0
        %1250 = vmatpush2.bf16.xpose.msra.mxu0 0
        %1251 = vmatprep.subr.bf16.mxu0 0
        %1252 = vmatpush2.bf16.xpose.msra.mxu0 0
        %1253 = vmatprep.subr.bf16.mxu0 0
        %1254 = vmatpush2.bf16.xpose.msra.mxu0 0
        %1255 = vmatprep.subr.bf16.mxu0 0
        %1256 = vmatpush2.bf16.xpose.msra.mxu0 0
        %1257 = vmatprep.subr.bf16.mxu0 0
        %1258 = vmatpush2.bf16.xpose.msra.mxu0 0
        %1259 = vmatprep.subr.bf16.mxu0 0
        %1260 = vmatpush2.bf16.xpose.msra.mxu0 0
        %1261 = vmatprep.subr.bf16.mxu0 0
        %1262 = vmatpush2.bf16.xpose.msra.mxu0 0
        %1263 = vmatprep.mubr.bf16.mxu0 0
        %1264 = vmatmul.mubr.bf16.gmra.mxu0 %v1226
        %v1265 = vpop.f32.mrf.mxu0
        %v1266 = vadd.f32 0.0, %v1265
        %v1267 = vpop.f32.mrf.mxu0
        %v1268 = vpop.f32.mrf.mxu0
        %v1269 = vadd.f32 0.0, %v1268
        %v1270 = vpop.f32.mrf.mxu0
        %1271 = vdwg.mxu0
        %v1272 = vmul.f32 %v1266, 0.25
        %v1273 = vmul.f32 %v1269, 0.25
        %v1274 = vadd.f32 %v1272, %v874
        %v1275 = vadd.f32 %v1273, %v874
        %v1276 = vsel %vm820, %v1274, -inf
        %1277 = vmax.xlane.f32.xlu0 %v1276
        %v1278 = vpop.xlane.xlu0 %1277
        %v1279 = vsel %vm820, %v1275, -inf
        %1280 = vmax.xlane.f32.xlu0 %v1279
        %v1281 = vpop.xlane.xlu0 %1280
        %v1282 = vsub.f32 %v1274, %v1278
        %v1283 = vsub.f32 %v1275, %v1281
        %v1284 = vmul.f32 %v1282, 1.442695
        %v1285 = vpow.pop %v1284
        %v1286 = vmul.f32 %v1283, 1.442695
        %v1287 = vpow.pop %v1286
        %v1288 = vsel %vm820, %v1285, 0.0
        %1289 = vadd.xlane.f32.xlu0 %v1288
        %v1290 = vpop.xlane.xlu0 %1289
        %v1291 = vsel %vm820, %v1287, 0.0
        %1292 = vadd.xlane.f32.xlu0 %v1291
        %v1293 = vpop.xlane.xlu0 %1292
        %v1294 = vrcp.pop %v1290
        %v1295 = vrcp.pop %v1293
        %v1296 = vmul.f32 %v1285, %v1294
        %v1297 = vmul.f32 %v1287, %v1295
        %v1298 = vpack.c.bf16 %v1297, %v1296
        %1299 = vrot.lane.b32.xlu0 %v816, 80
        %v1300 = vpop.permute.xlu0 %1299
        %v1303 = vsel %vm820, %v1298, 0
        %1305 = vmatprep.subr.bf16.mxu0 0
        %1306 = vmatpush1.bf16.msra.mxu0 0
        %1307 = vmatprep.subr.bf16.mxu0 0
        %1308 = vmatpush1.bf16.msra.mxu0 0
        %1309 = vmatprep.subr.bf16.mxu0 0
        %1310 = vmatpush1.bf16.msra.mxu0 0
        %1311 = vmatprep.subr.bf16.mxu0 0
        %1312 = vmatpush1.bf16.msra.mxu0 0
        %1313 = vmatprep.subr.bf16.mxu0 0
        %1314 = vmatpush1.bf16.msra.mxu0 0
        %1315 = vmatprep.subr.bf16.mxu0 0
        %1316 = vmatpush1.bf16.msra.mxu0 0
        %1317 = vmatprep.subr.bf16.mxu0 0
        %1318 = vmatpush1.bf16.msra.mxu0 0
        %1319 = vmatprep.subr.bf16.mxu0 0
        %1320 = vmatpush1.bf16.msra.mxu0 %v1300
        %1321 = vmatprep.subr.bf16.mxu0 0
        %1322 = vmatpush2.bf16.msra.mxu0 0
        %1323 = vmatprep.subr.bf16.mxu0 0
        %1324 = vmatpush2.bf16.msra.mxu0 0
        %1325 = vmatprep.subr.bf16.mxu0 0
        %1326 = vmatpush2.bf16.msra.mxu0 0
        %1327 = vmatprep.subr.bf16.mxu0 0
        %1328 = vmatpush2.bf16.msra.mxu0 0
        %1329 = vmatprep.subr.bf16.mxu0 0
        %1330 = vmatpush2.bf16.msra.mxu0 0
        %1331 = vmatprep.subr.bf16.mxu0 0
        %1332 = vmatpush2.bf16.msra.mxu0 0
        %1333 = vmatprep.subr.bf16.mxu0 0
        %1334 = vmatpush2.bf16.msra.mxu0 0
        %1335 = vmatprep.subr.bf16.mxu0 0
        %1336 = vmatpush2.bf16.msra.mxu0 0
        %1337 = vmatprep.mubr.bf16.mxu0 0
        %1338 = vmatmul.mubr.bf16.gmra.mxu0 %v1303
        %v1339 = vpop.f32.mrf.mxu0
        %v1340 = vadd.f32 0.0, %v1339
        %v1341 = vpop.f32.mrf.mxu0
        %v1342 = vpop.f32.mrf.mxu0
        %v1343 = vadd.f32 0.0, %v1342
        %v1344 = vpop.f32.mrf.mxu0
        %1345 = vdwg.mxu0
        %1348 = vrot.lane.b32.xlu0 %v1340, 48
        %v1349 = vpop.permute.xlu0 %1348
        %1350 = vrot.lane.b32.xlu0 %v1343, 48
        %v1351 = vpop.permute.xlu0 %1350
        %vm1354 = vcmask 523648
        %1355 = vst.msk [vmem:[#allocation2] sm:$0xff] %vm1354, %v1349
        %1356 = vst.msk [vmem:[#allocation2 + $0x10] sm:$0xff] %vm1354, %v1351
        %v1357 = vpack.c.bf16 %v768, %v764
        %1358 = vrot.lane.b32.xlu0 %v814, 64
        %v1359 = vpop.permute.xlu0 %1358
        %v1361 = vsel %vm820, %v1359, 0
        %v1364 = vsel %vm820, %v1357, 0
        %1366 = vmatprep.subr.bf16.mxu0 0
        %1367 = vmatpush1.bf16.xpose.msra.mxu0 0
        %1368 = vmatprep.subr.bf16.mxu0 0
        %1369 = vmatpush1.bf16.xpose.msra.mxu0 0
        %1370 = vmatprep.subr.bf16.mxu0 0
        %1371 = vmatpush1.bf16.xpose.msra.mxu0 0
        %1372 = vmatprep.subr.bf16.mxu0 0
        %1373 = vmatpush1.bf16.xpose.msra.mxu0 0
        %1374 = vmatprep.subr.bf16.mxu0 0
        %1375 = vmatpush1.bf16.xpose.msra.mxu0 0
        %1376 = vmatprep.subr.bf16.mxu0 0
        %1377 = vmatpush1.bf16.xpose.msra.mxu0 0
        %1378 = vmatprep.subr.bf16.mxu0 0
        %1379 = vmatpush1.bf16.xpose.msra.mxu0 0
        %1380 = vmatprep.subr.bf16.mxu0 0
        %1381 = vmatpush1.bf16.xpose.msra.mxu0 %v1364
        %1382 = vmatprep.subr.bf16.mxu0 0
        %1383 = vmatpush2.bf16.xpose.msra.mxu0 0
        %1384 = vmatprep.subr.bf16.mxu0 0
        %1385 = vmatpush2.bf16.xpose.msra.mxu0 0
        %1386 = vmatprep.subr.bf16.mxu0 0
        %1387 = vmatpush2.bf16.xpose.msra.mxu0 0
        %1388 = vmatprep.subr.bf16.mxu0 0
        %1389 = vmatpush2.bf16.xpose.msra.mxu0 0
        %1390 = vmatprep.subr.bf16.mxu0 0
        %1391 = vmatpush2.bf16.xpose.msra.mxu0 0
        %1392 = vmatprep.subr.bf16.mxu0 0
        %1393 = vmatpush2.bf16.xpose.msra.mxu0 0
        %1394 = vmatprep.subr.bf16.mxu0 0
        %1395 = vmatpush2.bf16.xpose.msra.mxu0 0
        %1396 = vmatprep.subr.bf16.mxu0 0
        %1397 = vmatpush2.bf16.xpose.msra.mxu0 0
        %1398 = vmatprep.mubr.bf16.mxu0 0
        %1399 = vmatmul.mubr.bf16.gmra.mxu0 %v1361
        %v1400 = vpop.f32.mrf.mxu0
        %v1401 = vadd.f32 0.0, %v1400
        %v1402 = vpop.f32.mrf.mxu0
        %v1403 = vpop.f32.mrf.mxu0
        %v1404 = vadd.f32 0.0, %v1403
        %v1405 = vpop.f32.mrf.mxu0
        %1406 = vdwg.mxu0
        %v1407 = vmul.f32 %v1401, 0.25
        %v1408 = vmul.f32 %v1404, 0.25
        %v1409 = vadd.f32 %v1407, %v874
        %v1410 = vadd.f32 %v1408, %v874
        %v1411 = vsel %vm820, %v1409, -inf
        %1412 = vmax.xlane.f32.xlu0 %v1411
        %v1413 = vpop.xlane.xlu0 %1412
        %v1414 = vsel %vm820, %v1410, -inf
        %1415 = vmax.xlane.f32.xlu0 %v1414
        %v1416 = vpop.xlane.xlu0 %1415
        %v1417 = vsub.f32 %v1409, %v1413
        %v1418 = vsub.f32 %v1410, %v1416
        %v1419 = vmul.f32 %v1417, 1.442695
        %v1420 = vpow.pop %v1419
        %v1421 = vmul.f32 %v1418, 1.442695
        %v1422 = vpow.pop %v1421
        %v1423 = vsel %vm820, %v1420, 0.0
        %1424 = vadd.xlane.f32.xlu0 %v1423
        %v1425 = vpop.xlane.xlu0 %1424
        %v1426 = vsel %vm820, %v1422, 0.0
        %1427 = vadd.xlane.f32.xlu0 %v1426
        %v1428 = vpop.xlane.xlu0 %1427
        %v1429 = vrcp.pop %v1425
        %v1430 = vrcp.pop %v1428
        %v1431 = vmul.f32 %v1420, %v1429
        %v1432 = vmul.f32 %v1422, %v1430
        %v1433 = vpack.c.bf16 %v1432, %v1431
        %1434 = vrot.lane.b32.xlu0 %v816, 64
        %v1435 = vpop.permute.xlu0 %1434
        %v1438 = vsel %vm820, %v1433, 0
        %1440 = vmatprep.subr.bf16.mxu0 0
        %1441 = vmatpush1.bf16.msra.mxu0 0
        %1442 = vmatprep.subr.bf16.mxu0 0
        %1443 = vmatpush1.bf16.msra.mxu0 0
        %1444 = vmatprep.subr.bf16.mxu0 0
        %1445 = vmatpush1.bf16.msra.mxu0 0
        %1446 = vmatprep.subr.bf16.mxu0 0
        %1447 = vmatpush1.bf16.msra.mxu0 0
        %1448 = vmatprep.subr.bf16.mxu0 0
        %1449 = vmatpush1.bf16.msra.mxu0 0
        %1450 = vmatprep.subr.bf16.mxu0 0
        %1451 = vmatpush1.bf16.msra.mxu0 0
        %1452 = vmatprep.subr.bf16.mxu0 0
        %1453 = vmatpush1.bf16.msra.mxu0 0
        %1454 = vmatprep.subr.bf16.mxu0 0
        %1455 = vmatpush1.bf16.msra.mxu0 %v1435
        %1456 = vmatprep.subr.bf16.mxu0 0
        %1457 = vmatpush2.bf16.msra.mxu0 0
        %1458 = vmatprep.subr.bf16.mxu0 0
        %1459 = vmatpush2.bf16.msra.mxu0 0
        %1460 = vmatprep.subr.bf16.mxu0 0
        %1461 = vmatpush2.bf16.msra.mxu0 0
        %1462 = vmatprep.subr.bf16.mxu0 0
        %1463 = vmatpush2.bf16.msra.mxu0 0
        %1464 = vmatprep.subr.bf16.mxu0 0
        %1465 = vmatpush2.bf16.msra.mxu0 0
        %1466 = vmatprep.subr.bf16.mxu0 0
        %1467 = vmatpush2.bf16.msra.mxu0 0
        %1468 = vmatprep.subr.bf16.mxu0 0
        %1469 = vmatpush2.bf16.msra.mxu0 0
        %1470 = vmatprep.subr.bf16.mxu0 0
        %1471 = vmatpush2.bf16.msra.mxu0 0
        %1472 = vmatprep.mubr.bf16.mxu0 0
        %1473 = vmatmul.mubr.bf16.gmra.mxu0 %v1438
        %v1474 = vpop.f32.mrf.mxu0
        %v1475 = vadd.f32 0.0, %v1474
        %v1476 = vpop.f32.mrf.mxu0
        %v1477 = vpop.f32.mrf.mxu0
        %v1478 = vadd.f32 0.0, %v1477
        %v1479 = vpop.f32.mrf.mxu0
        %1480 = vdwg.mxu0
        %1483 = vrot.lane.b32.xlu0 %v1475, 64
        %v1484 = vpop.permute.xlu0 %1483
        %1485 = vrot.lane.b32.xlu0 %v1478, 64
        %v1486 = vpop.permute.xlu0 %1485
        %vm1489 = vcmask 654848
        %1490 = vst.msk [vmem:[#allocation2] sm:$0xff] %vm1489, %v1484
        %1491 = vst.msk [vmem:[#allocation2 + $0x10] sm:$0xff] %vm1489, %v1486
        %1492 = vrot.lane.b32.xlu0 %v814, 48
        %v1493 = vpop.permute.xlu0 %1492
        %1495 = vrot.lane.b32.xlu0 %v1357, 112
        %v1496 = vpop.permute.xlu0 %1495
        %v1498 = vsel %vm820, %v1493, 0
        %v1501 = vsel %vm820, %v1496, 0
        %1503 = vmatprep.subr.bf16.mxu0 0
        %1504 = vmatpush1.bf16.xpose.msra.mxu0 0
        %1505 = vmatprep.subr.bf16.mxu0 0
        %1506 = vmatpush1.bf16.xpose.msra.mxu0 0
        %1507 = vmatprep.subr.bf16.mxu0 0
        %1508 = vmatpush1.bf16.xpose.msra.mxu0 0
        %1509 = vmatprep.subr.bf16.mxu0 0
        %1510 = vmatpush1.bf16.xpose.msra.mxu0 0
        %1511 = vmatprep.subr.bf16.mxu0 0
        %1512 = vmatpush1.bf16.xpose.msra.mxu0 0
        %1513 = vmatprep.subr.bf16.mxu0 0
        %1514 = vmatpush1.bf16.xpose.msra.mxu0 0
        %1515 = vmatprep.subr.bf16.mxu0 0
        %1516 = vmatpush1.bf16.xpose.msra.mxu0 0
        %1517 = vmatprep.subr.bf16.mxu0 0
        %1518 = vmatpush1.bf16.xpose.msra.mxu0 %v1501
        %1519 = vmatprep.subr.bf16.mxu0 0
        %1520 = vmatpush2.bf16.xpose.msra.mxu0 0
        %1521 = vmatprep.subr.bf16.mxu0 0
        %1522 = vmatpush2.bf16.xpose.msra.mxu0 0
        %1523 = vmatprep.subr.bf16.mxu0 0
        %1524 = vmatpush2.bf16.xpose.msra.mxu0 0
        %1525 = vmatprep.subr.bf16.mxu0 0
        %1526 = vmatpush2.bf16.xpose.msra.mxu0 0
        %1527 = vmatprep.subr.bf16.mxu0 0
        %1528 = vmatpush2.bf16.xpose.msra.mxu0 0
        %1529 = vmatprep.subr.bf16.mxu0 0
        %1530 = vmatpush2.bf16.xpose.msra.mxu0 0
        %1531 = vmatprep.subr.bf16.mxu0 0
        %1532 = vmatpush2.bf16.xpose.msra.mxu0 0
        %1533 = vmatprep.subr.bf16.mxu0 0
        %1534 = vmatpush2.bf16.xpose.msra.mxu0 0
        %1535 = vmatprep.mubr.bf16.mxu0 0
        %1536 = vmatmul.mubr.bf16.gmra.mxu0 %v1498
        %v1537 = vpop.f32.mrf.mxu0
        %v1538 = vadd.f32 0.0, %v1537
        %v1539 = vpop.f32.mrf.mxu0
        %v1540 = vpop.f32.mrf.mxu0
        %v1541 = vadd.f32 0.0, %v1540
        %v1542 = vpop.f32.mrf.mxu0
        %1543 = vdwg.mxu0
        %v1544 = vmul.f32 %v1538, 0.25
        %v1545 = vmul.f32 %v1541, 0.25
        %v1546 = vadd.f32 %v1544, %v874
        %v1547 = vadd.f32 %v1545, %v874
        %v1548 = vsel %vm820, %v1546, -inf
        %1549 = vmax.xlane.f32.xlu0 %v1548
        %v1550 = vpop.xlane.xlu0 %1549
        %v1551 = vsel %vm820, %v1547, -inf
        %1552 = vmax.xlane.f32.xlu0 %v1551
        %v1553 = vpop.xlane.xlu0 %1552
        %v1554 = vsub.f32 %v1546, %v1550
        %v1555 = vsub.f32 %v1547, %v1553
        %v1556 = vmul.f32 %v1554, 1.442695
        %v1557 = vpow.pop %v1556
        %v1558 = vmul.f32 %v1555, 1.442695
        %v1559 = vpow.pop %v1558
        %v1560 = vsel %vm820, %v1557, 0.0
        %1561 = vadd.xlane.f32.xlu0 %v1560
        %v1562 = vpop.xlane.xlu0 %1561
        %v1563 = vsel %vm820, %v1559, 0.0
        %1564 = vadd.xlane.f32.xlu0 %v1563
        %v1565 = vpop.xlane.xlu0 %1564
        %v1566 = vrcp.pop %v1562
        %v1567 = vrcp.pop %v1565
        %v1568 = vmul.f32 %v1557, %v1566
        %v1569 = vmul.f32 %v1559, %v1567
        %v1570 = vpack.c.bf16 %v1569, %v1568
        %1571 = vrot.lane.b32.xlu0 %v816, 48
        %v1572 = vpop.permute.xlu0 %1571
        %v1575 = vsel %vm820, %v1570, 0
        %1577 = vmatprep.subr.bf16.mxu0 0
        %1578 = vmatpush1.bf16.msra.mxu0 0
        %1579 = vmatprep.subr.bf16.mxu0 0
        %1580 = vmatpush1.bf16.msra.mxu0 0
        %1581 = vmatprep.subr.bf16.mxu0 0
        %1582 = vmatpush1.bf16.msra.mxu0 0
        %1583 = vmatprep.subr.bf16.mxu0 0
        %1584 = vmatpush1.bf16.msra.mxu0 0
        %1585 = vmatprep.subr.bf16.mxu0 0
        %1586 = vmatpush1.bf16.msra.mxu0 0
        %1587 = vmatprep.subr.bf16.mxu0 0
        %1588 = vmatpush1.bf16.msra.mxu0 0
        %1589 = vmatprep.subr.bf16.mxu0 0
        %1590 = vmatpush1.bf16.msra.mxu0 0
        %1591 = vmatprep.subr.bf16.mxu0 0
        %1592 = vmatpush1.bf16.msra.mxu0 %v1572
        %1593 = vmatprep.subr.bf16.mxu0 0
        %1594 = vmatpush2.bf16.msra.mxu0 0
        %1595 = vmatprep.subr.bf16.mxu0 0
        %1596 = vmatpush2.bf16.msra.mxu0 0
        %1597 = vmatprep.subr.bf16.mxu0 0
        %1598 = vmatpush2.bf16.msra.mxu0 0
        %1599 = vmatprep.subr.bf16.mxu0 0
        %1600 = vmatpush2.bf16.msra.mxu0 0
        %1601 = vmatprep.subr.bf16.mxu0 0
        %1602 = vmatpush2.bf16.msra.mxu0 0
        %1603 = vmatprep.subr.bf16.mxu0 0
        %1604 = vmatpush2.bf16.msra.mxu0 0
        %1605 = vmatprep.subr.bf16.mxu0 0
        %1606 = vmatpush2.bf16.msra.mxu0 0
        %1607 = vmatprep.subr.bf16.mxu0 0
        %1608 = vmatpush2.bf16.msra.mxu0 0
        %1609 = vmatprep.mubr.bf16.mxu0 0
        %1610 = vmatmul.mubr.bf16.gmra.mxu0 %v1575
        %v1611 = vpop.f32.mrf.mxu0
        %v1612 = vadd.f32 0.0, %v1611
        %v1613 = vpop.f32.mrf.mxu0
        %v1614 = vpop.f32.mrf.mxu0
        %v1615 = vadd.f32 0.0, %v1614
        %v1616 = vpop.f32.mrf.mxu0
        %1617 = vdwg.mxu0
        %1620 = vrot.lane.b32.xlu0 %v1612, 80
        %v1621 = vpop.permute.xlu0 %1620
        %1622 = vrot.lane.b32.xlu0 %v1615, 80
        %v1623 = vpop.permute.xlu0 %1622
        %vm1626 = vcmask 786048
        %1627 = vst.msk [vmem:[#allocation2] sm:$0xff] %vm1626, %v1621
        %1628 = vst.msk [vmem:[#allocation2 + $0x10] sm:$0xff] %vm1626, %v1623
        %1629 = vrot.lane.b32.xlu0 %v814, 32
        %v1630 = vpop.permute.xlu0 %1629
        %1631 = vrot.lane.b32.xlu0 %v1357, 96
        %v1632 = vpop.permute.xlu0 %1631
        %v1634 = vsel %vm820, %v1630, 0
        %v1637 = vsel %vm820, %v1632, 0
        %1639 = vmatprep.subr.bf16.mxu0 0
        %1640 = vmatpush1.bf16.xpose.msra.mxu0 0
        %1641 = vmatprep.subr.bf16.mxu0 0
        %1642 = vmatpush1.bf16.xpose.msra.mxu0 0
        %1643 = vmatprep.subr.bf16.mxu0 0
        %1644 = vmatpush1.bf16.xpose.msra.mxu0 0
        %1645 = vmatprep.subr.bf16.mxu0 0
        %1646 = vmatpush1.bf16.xpose.msra.mxu0 0
        %1647 = vmatprep.subr.bf16.mxu0 0
        %1648 = vmatpush1.bf16.xpose.msra.mxu0 0
        %1649 = vmatprep.subr.bf16.mxu0 0
        %1650 = vmatpush1.bf16.xpose.msra.mxu0 0
        %1651 = vmatprep.subr.bf16.mxu0 0
        %1652 = vmatpush1.bf16.xpose.msra.mxu0 0
        %1653 = vmatprep.subr.bf16.mxu0 0
        %1654 = vmatpush1.bf16.xpose.msra.mxu0 %v1637
        %1655 = vmatprep.subr.bf16.mxu0 0
        %1656 = vmatpush2.bf16.xpose.msra.mxu0 0
        %1657 = vmatprep.subr.bf16.mxu0 0
        %1658 = vmatpush2.bf16.xpose.msra.mxu0 0
        %1659 = vmatprep.subr.bf16.mxu0 0
        %1660 = vmatpush2.bf16.xpose.msra.mxu0 0
        %1661 = vmatprep.subr.bf16.mxu0 0
        %1662 = vmatpush2.bf16.xpose.msra.mxu0 0
        %1663 = vmatprep.subr.bf16.mxu0 0
        %1664 = vmatpush2.bf16.xpose.msra.mxu0 0
        %1665 = vmatprep.subr.bf16.mxu0 0
        %1666 = vmatpush2.bf16.xpose.msra.mxu0 0
        %1667 = vmatprep.subr.bf16.mxu0 0
        %1668 = vmatpush2.bf16.xpose.msra.mxu0 0
        %1669 = vmatprep.subr.bf16.mxu0 0
        %1670 = vmatpush2.bf16.xpose.msra.mxu0 0
        %1671 = vmatprep.mubr.bf16.mxu0 0
        %1672 = vmatmul.mubr.bf16.gmra.mxu0 %v1634
        %v1673 = vpop.f32.mrf.mxu0
        %v1674 = vadd.f32 0.0, %v1673
        %v1675 = vpop.f32.mrf.mxu0
        %v1676 = vpop.f32.mrf.mxu0
        %v1677 = vadd.f32 0.0, %v1676
        %v1678 = vpop.f32.mrf.mxu0
        %1679 = vdwg.mxu0
        %v1680 = vmul.f32 %v1674, 0.25
        %v1681 = vmul.f32 %v1677, 0.25
        %v1682 = vadd.f32 %v1680, %v874
        %v1683 = vadd.f32 %v1681, %v874
        %v1684 = vsel %vm820, %v1682, -inf
        %1685 = vmax.xlane.f32.xlu0 %v1684
        %v1686 = vpop.xlane.xlu0 %1685
        %v1687 = vsel %vm820, %v1683, -inf
        %1688 = vmax.xlane.f32.xlu0 %v1687
        %v1689 = vpop.xlane.xlu0 %1688
        %v1690 = vsub.f32 %v1682, %v1686
        %v1691 = vsub.f32 %v1683, %v1689
        %v1692 = vmul.f32 %v1690, 1.442695
        %v1693 = vpow.pop %v1692
        %v1694 = vmul.f32 %v1691, 1.442695
        %v1695 = vpow.pop %v1694
        %v1696 = vsel %vm820, %v1693, 0.0
        %1697 = vadd.xlane.f32.xlu0 %v1696
        %v1698 = vpop.xlane.xlu0 %1697
        %v1699 = vsel %vm820, %v1695, 0.0
        %1700 = vadd.xlane.f32.xlu0 %v1699
        %v1701 = vpop.xlane.xlu0 %1700
        %v1702 = vrcp.pop %v1698
        %v1703 = vrcp.pop %v1701
        %v1704 = vmul.f32 %v1693, %v1702
        %v1705 = vmul.f32 %v1695, %v1703
        %v1706 = vpack.c.bf16 %v1705, %v1704
        %1707 = vrot.lane.b32.xlu0 %v816, 32
        %v1708 = vpop.permute.xlu0 %1707
        %v1711 = vsel %vm820, %v1706, 0
        %1713 = vmatprep.subr.bf16.mxu0 0
        %1714 = vmatpush1.bf16.msra.mxu0 0
        %1715 = vmatprep.subr.bf16.mxu0 0
        %1716 = vmatpush1.bf16.msra.mxu0 0
        %1717 = vmatprep.subr.bf16.mxu0 0
        %1718 = vmatpush1.bf16.msra.mxu0 0
        %1719 = vmatprep.subr.bf16.mxu0 0
        %1720 = vmatpush1.bf16.msra.mxu0 0
        %1721 = vmatprep.subr.bf16.mxu0 0
        %1722 = vmatpush1.bf16.msra.mxu0 0
        %1723 = vmatprep.subr.bf16.mxu0 0
        %1724 = vmatpush1.bf16.msra.mxu0 0
        %1725 = vmatprep.subr.bf16.mxu0 0
        %1726 = vmatpush1.bf16.msra.mxu0 0
        %1727 = vmatprep.subr.bf16.mxu0 0
        %1728 = vmatpush1.bf16.msra.mxu0 %v1708
        %1729 = vmatprep.subr.bf16.mxu0 0
        %1730 = vmatpush2.bf16.msra.mxu0 0
        %1731 = vmatprep.subr.bf16.mxu0 0
        %1732 = vmatpush2.bf16.msra.mxu0 0
        %1733 = vmatprep.subr.bf16.mxu0 0
        %1734 = vmatpush2.bf16.msra.mxu0 0
        %1735 = vmatprep.subr.bf16.mxu0 0
        %1736 = vmatpush2.bf16.msra.mxu0 0
        %1737 = vmatprep.subr.bf16.mxu0 0
        %1738 = vmatpush2.bf16.msra.mxu0 0
        %1739 = vmatprep.subr.bf16.mxu0 0
        %1740 = vmatpush2.bf16.msra.mxu0 0
        %1741 = vmatprep.subr.bf16.mxu0 0
        %1742 = vmatpush2.bf16.msra.mxu0 0
        %1743 = vmatprep.subr.bf16.mxu0 0
        %1744 = vmatpush2.bf16.msra.mxu0 0
        %1745 = vmatprep.mubr.bf16.mxu0 0
        %1746 = vmatmul.mubr.bf16.gmra.mxu0 %v1711
        %v1747 = vpop.f32.mrf.mxu0
        %v1748 = vadd.f32 0.0, %v1747
        %v1749 = vpop.f32.mrf.mxu0
        %v1750 = vpop.f32.mrf.mxu0
        %v1751 = vadd.f32 0.0, %v1750
        %v1752 = vpop.f32.mrf.mxu0
        %1753 = vdwg.mxu0
        %1756 = vrot.lane.b32.xlu0 %v1748, 96
        %v1757 = vpop.permute.xlu0 %1756
        %1758 = vrot.lane.b32.xlu0 %v1751, 96
        %v1759 = vpop.permute.xlu0 %1758
        %vm1762 = vcmask 917248
        %1763 = vst.msk [vmem:[#allocation2] sm:$0xff] %vm1762, %v1757
        %1764 = vst.msk [vmem:[#allocation2 + $0x10] sm:$0xff] %vm1762, %v1759
        %1765 = vrot.lane.b32.xlu0 %v814, 16
        %v1766 = vpop.permute.xlu0 %1765
        %1767 = vrot.lane.b32.xlu0 %v1357, 80
        %v1768 = vpop.permute.xlu0 %1767
        %v1770 = vsel %vm820, %v1766, 0
        %v1773 = vsel %vm820, %v1768, 0
        %1775 = vmatprep.subr.bf16.mxu0 0
        %1776 = vmatpush1.bf16.xpose.msra.mxu0 0
        %1777 = vmatprep.subr.bf16.mxu0 0
        %1778 = vmatpush1.bf16.xpose.msra.mxu0 0
        %1779 = vmatprep.subr.bf16.mxu0 0
        %1780 = vmatpush1.bf16.xpose.msra.mxu0 0
        %1781 = vmatprep.subr.bf16.mxu0 0
        %1782 = vmatpush1.bf16.xpose.msra.mxu0 0
        %1783 = vmatprep.subr.bf16.mxu0 0
        %1784 = vmatpush1.bf16.xpose.msra.mxu0 0
        %1785 = vmatprep.subr.bf16.mxu0 0
        %1786 = vmatpush1.bf16.xpose.msra.mxu0 0
        %1787 = vmatprep.subr.bf16.mxu0 0
        %1788 = vmatpush1.bf16.xpose.msra.mxu0 0
        %1789 = vmatprep.subr.bf16.mxu0 0
        %1790 = vmatpush1.bf16.xpose.msra.mxu0 %v1773
        %1791 = vmatprep.subr.bf16.mxu0 0
        %1792 = vmatpush2.bf16.xpose.msra.mxu0 0
        %1793 = vmatprep.subr.bf16.mxu0 0
        %1794 = vmatpush2.bf16.xpose.msra.mxu0 0
        %1795 = vmatprep.subr.bf16.mxu0 0
        %1796 = vmatpush2.bf16.xpose.msra.mxu0 0
        %1797 = vmatprep.subr.bf16.mxu0 0
        %1798 = vmatpush2.bf16.xpose.msra.mxu0 0
        %1799 = vmatprep.subr.bf16.mxu0 0
        %1800 = vmatpush2.bf16.xpose.msra.mxu0 0
        %1801 = vmatprep.subr.bf16.mxu0 0
        %1802 = vmatpush2.bf16.xpose.msra.mxu0 0
        %1803 = vmatprep.subr.bf16.mxu0 0
        %1804 = vmatpush2.bf16.xpose.msra.mxu0 0
        %1805 = vmatprep.subr.bf16.mxu0 0
        %1806 = vmatpush2.bf16.xpose.msra.mxu0 0
        %1807 = vmatprep.mubr.bf16.mxu0 0
        %1808 = vmatmul.mubr.bf16.gmra.mxu0 %v1770
        %v1809 = vpop.f32.mrf.mxu0
        %v1810 = vadd.f32 0.0, %v1809
        %v1811 = vpop.f32.mrf.mxu0
        %v1812 = vpop.f32.mrf.mxu0
        %v1813 = vadd.f32 0.0, %v1812
        %v1814 = vpop.f32.mrf.mxu0
        %1815 = vdwg.mxu0
        %v1816 = vmul.f32 %v1810, 0.25
        %v1817 = vmul.f32 %v1813, 0.25
        %v1818 = vadd.f32 %v1816, %v874
        %v1819 = vadd.f32 %v1817, %v874
        %v1820 = vsel %vm820, %v1818, -inf
        %1821 = vmax.xlane.f32.xlu0 %v1820
        %v1822 = vpop.xlane.xlu0 %1821
        %v1823 = vsel %vm820, %v1819, -inf
        %1824 = vmax.xlane.f32.xlu0 %v1823
        %v1825 = vpop.xlane.xlu0 %1824
        %v1826 = vsub.f32 %v1818, %v1822
        %v1827 = vsub.f32 %v1819, %v1825
        %v1828 = vmul.f32 %v1826, 1.442695
        %v1829 = vpow.pop %v1828
        %v1830 = vmul.f32 %v1827, 1.442695
        %v1831 = vpow.pop %v1830
        %v1832 = vsel %vm820, %v1829, 0.0
        %1833 = vadd.xlane.f32.xlu0 %v1832
        %v1834 = vpop.xlane.xlu0 %1833
        %v1835 = vsel %vm820, %v1831, 0.0
        %1836 = vadd.xlane.f32.xlu0 %v1835
        %v1837 = vpop.xlane.xlu0 %1836
        %v1838 = vrcp.pop %v1834
        %v1839 = vrcp.pop %v1837
        %v1840 = vmul.f32 %v1829, %v1838
        %v1841 = vmul.f32 %v1831, %v1839
        %v1842 = vpack.c.bf16 %v1841, %v1840
        %1843 = vrot.lane.b32.xlu0 %v816, 16
        %v1844 = vpop.permute.xlu0 %1843
        %v1847 = vsel %vm820, %v1842, 0
        %1849 = vmatprep.subr.bf16.mxu0 0
        %1850 = vmatpush1.bf16.msra.mxu0 0
        %1851 = vmatprep.subr.bf16.mxu0 0
        %1852 = vmatpush1.bf16.msra.mxu0 0
        %1853 = vmatprep.subr.bf16.mxu0 0
        %1854 = vmatpush1.bf16.msra.mxu0 0
        %1855 = vmatprep.subr.bf16.mxu0 0
        %1856 = vmatpush1.bf16.msra.mxu0 0
        %1857 = vmatprep.subr.bf16.mxu0 0
        %1858 = vmatpush1.bf16.msra.mxu0 0
        %1859 = vmatprep.subr.bf16.mxu0 0
        %1860 = vmatpush1.bf16.msra.mxu0 0
        %1861 = vmatprep.subr.bf16.mxu0 0
        %1862 = vmatpush1.bf16.msra.mxu0 0
        %1863 = vmatprep.subr.bf16.mxu0 0
        %1864 = vmatpush1.bf16.msra.mxu0 %v1844
        %1865 = vmatprep.subr.bf16.mxu0 0
        %1866 = vmatpush2.bf16.msra.mxu0 0
        %1867 = vmatprep.subr.bf16.mxu0 0
        %1868 = vmatpush2.bf16.msra.mxu0 0
        %1869 = vmatprep.subr.bf16.mxu0 0
        %1870 = vmatpush2.bf16.msra.mxu0 0
        %1871 = vmatprep.subr.bf16.mxu0 0
        %1872 = vmatpush2.bf16.msra.mxu0 0
        %1873 = vmatprep.subr.bf16.mxu0 0
        %1874 = vmatpush2.bf16.msra.mxu0 0
        %1875 = vmatprep.subr.bf16.mxu0 0
        %1876 = vmatpush2.bf16.msra.mxu0 0
        %1877 = vmatprep.subr.bf16.mxu0 0
        %1878 = vmatpush2.bf16.msra.mxu0 0
        %1879 = vmatprep.subr.bf16.mxu0 0
        %1880 = vmatpush2.bf16.msra.mxu0 0
        %1881 = vmatprep.mubr.bf16.mxu0 0
        %1882 = vmatmul.mubr.bf16.gmra.mxu0 %v1847
        %v1883 = vpop.f32.mrf.mxu0
        %v1884 = vadd.f32 0.0, %v1883
        %v1885 = vpop.f32.mrf.mxu0
        %v1886 = vpop.f32.mrf.mxu0
        %v1887 = vadd.f32 0.0, %v1886
        %v1888 = vpop.f32.mrf.mxu0
        %1889 = vdwg.mxu0
        %1892 = vrot.lane.b32.xlu0 %v1884, 112
        %v1893 = vpop.permute.xlu0 %1892
        %1894 = vrot.lane.b32.xlu0 %v1887, 112
        %v1895 = vpop.permute.xlu0 %1894
        %vm1898 = vcmask 1048448
        %1899 = vst.msk [vmem:[#allocation2] sm:$0xff] %vm1898, %v1893
        %1900 = vst.msk [vmem:[#allocation2 + $0x10] sm:$0xff] %vm1898, %v1895
        %v1901 = vpack.c.bf16 %v810, %v807
        %1902 = vrot.lane.b32.xlu0 %v1357, 64
        %v1903 = vpop.permute.xlu0 %1902
        %v1905 = vsel %vm820, %v815, 0
        %v1908 = vsel %vm820, %v1903, 0
        %1910 = vmatprep.subr.bf16.mxu0 0
        %1911 = vmatpush1.bf16.xpose.msra.mxu0 0
        %1912 = vmatprep.subr.bf16.mxu0 0
        %1913 = vmatpush1.bf16.xpose.msra.mxu0 0
        %1914 = vmatprep.subr.bf16.mxu0 0
        %1915 = vmatpush1.bf16.xpose.msra.mxu0 0
        %1916 = vmatprep.subr.bf16.mxu0 0
        %1917 = vmatpush1.bf16.xpose.msra.mxu0 0
        %1918 = vmatprep.subr.bf16.mxu0 0
        %1919 = vmatpush1.bf16.xpose.msra.mxu0 0
        %1920 = vmatprep.subr.bf16.mxu0 0
        %1921 = vmatpush1.bf16.xpose.msra.mxu0 0
        %1922 = vmatprep.subr.bf16.mxu0 0
        %1923 = vmatpush1.bf16.xpose.msra.mxu0 0
        %1924 = vmatprep.subr.bf16.mxu0 0
        %1925 = vmatpush1.bf16.xpose.msra.mxu0 %v1908
        %1926 = vmatprep.subr.bf16.mxu0 0
        %1927 = vmatpush2.bf16.xpose.msra.mxu0 0
        %1928 = vmatprep.subr.bf16.mxu0 0
        %1929 = vmatpush2.bf16.xpose.msra.mxu0 0
        %1930 = vmatprep.subr.bf16.mxu0 0
        %1931 = vmatpush2.bf16.xpose.msra.mxu0 0
        %1932 = vmatprep.subr.bf16.mxu0 0
        %1933 = vmatpush2.bf16.xpose.msra.mxu0 0
        %1934 = vmatprep.subr.bf16.mxu0 0
        %1935 = vmatpush2.bf16.xpose.msra.mxu0 0
        %1936 = vmatprep.subr.bf16.mxu0 0
        %1937 = vmatpush2.bf16.xpose.msra.mxu0 0
        %1938 = vmatprep.subr.bf16.mxu0 0
        %1939 = vmatpush2.bf16.xpose.msra.mxu0 0
        %1940 = vmatprep.subr.bf16.mxu0 0
        %1941 = vmatpush2.bf16.xpose.msra.mxu0 0
        %1942 = vmatprep.mubr.bf16.mxu0 0
        %1943 = vmatmul.mubr.bf16.gmra.mxu0 %v1905
        %v1944 = vpop.f32.mrf.mxu0
        %v1945 = vadd.f32 0.0, %v1944
        %v1946 = vpop.f32.mrf.mxu0
        %v1947 = vpop.f32.mrf.mxu0
        %v1948 = vadd.f32 0.0, %v1947
        %v1949 = vpop.f32.mrf.mxu0
        %1950 = vdwg.mxu0
        %v1951 = vmul.f32 %v1945, 0.25
        %v1952 = vmul.f32 %v1948, 0.25
        %v1953 = vadd.f32 %v1951, %v874
        %v1954 = vadd.f32 %v1952, %v874
        %v1955 = vsel %vm820, %v1953, -inf
        %1956 = vmax.xlane.f32.xlu0 %v1955
        %v1957 = vpop.xlane.xlu0 %1956
        %v1958 = vsel %vm820, %v1954, -inf
        %1959 = vmax.xlane.f32.xlu0 %v1958
        %v1960 = vpop.xlane.xlu0 %1959
        %v1961 = vsub.f32 %v1953, %v1957
        %v1962 = vsub.f32 %v1954, %v1960
        %v1963 = vmul.f32 %v1961, 1.442695
        %v1964 = vpow.pop %v1963
        %v1965 = vmul.f32 %v1962, 1.442695
        %v1966 = vpow.pop %v1965
        %v1967 = vsel %vm820, %v1964, 0.0
        %1968 = vadd.xlane.f32.xlu0 %v1967
        %v1969 = vpop.xlane.xlu0 %1968
        %v1970 = vsel %vm820, %v1966, 0.0
        %1971 = vadd.xlane.f32.xlu0 %v1970
        %v1972 = vpop.xlane.xlu0 %1971
        %v1973 = vrcp.pop %v1969
        %v1974 = vrcp.pop %v1972
        %v1975 = vmul.f32 %v1964, %v1973
        %v1976 = vmul.f32 %v1966, %v1974
        %v1977 = vpack.c.bf16 %v1976, %v1975
        %v1979 = vsel %vm820, %v1977, 0
        %1981 = vmatprep.subr.bf16.mxu0 0
        %1982 = vmatpush1.bf16.msra.mxu0 0
        %1983 = vmatprep.subr.bf16.mxu0 0
        %1984 = vmatpush1.bf16.msra.mxu0 0
        %1985 = vmatprep.subr.bf16.mxu0 0
        %1986 = vmatpush1.bf16.msra.mxu0 0
        %1987 = vmatprep.subr.bf16.mxu0 0
        %1988 = vmatpush1.bf16.msra.mxu0 0
        %1989 = vmatprep.subr.bf16.mxu0 0
        %1990 = vmatpush1.bf16.msra.mxu0 0
        %1991 = vmatprep.subr.bf16.mxu0 0
        %1992 = vmatpush1.bf16.msra.mxu0 0
        %1993 = vmatprep.subr.bf16.mxu0 0
        %1994 = vmatpush1.bf16.msra.mxu0 0
        %1995 = vmatprep.subr.bf16.mxu0 0
        %1996 = vmatpush1.bf16.msra.mxu0 %v1901
        %1997 = vmatprep.subr.bf16.mxu0 0
        %1998 = vmatpush2.bf16.msra.mxu0 0
        %1999 = vmatprep.subr.bf16.mxu0 0
        %2000 = vmatpush2.bf16.msra.mxu0 0
        %2001 = vmatprep.subr.bf16.mxu0 0
        %2002 = vmatpush2.bf16.msra.mxu0 0
        %2003 = vmatprep.subr.bf16.mxu0 0
        %2004 = vmatpush2.bf16.msra.mxu0 0
        %2005 = vmatprep.subr.bf16.mxu0 0
        %2006 = vmatpush2.bf16.msra.mxu0 0
        %2007 = vmatprep.subr.bf16.mxu0 0
        %2008 = vmatpush2.bf16.msra.mxu0 0
        %2009 = vmatprep.subr.bf16.mxu0 0
        %2010 = vmatpush2.bf16.msra.mxu0 0
        %2011 = vmatprep.subr.bf16.mxu0 0
        %2012 = vmatpush2.bf16.msra.mxu0 0
        %2013 = vmatprep.mubr.bf16.mxu0 0
        %2014 = vmatmul.mubr.bf16.gmra.mxu0 %v1979
        %v2015 = vpop.f32.mrf.mxu0
        %v2016 = vadd.f32 0.0, %v2015
        %v2017 = vpop.f32.mrf.mxu0
        %v2018 = vpop.f32.mrf.mxu0
        %v2019 = vadd.f32 0.0, %v2018
        %v2020 = vpop.f32.mrf.mxu0
        %2021 = vdwg.mxu0
        %2022 = vst.msk [vmem:[#allocation2 + $0x8] sm:$0xff] %vm820, %v2016
        %2023 = vst.msk [vmem:[#allocation2 + $0x18] sm:$0xff] %vm820, %v2019
        %2024 = vrot.lane.b32.xlu0 %v815, 112
        %v2025 = vpop.permute.xlu0 %2024
        %2026 = vrot.lane.b32.xlu0 %v1357, 48
        %v2027 = vpop.permute.xlu0 %2026
        %v2029 = vsel %vm820, %v2025, 0
        %v2032 = vsel %vm820, %v2027, 0
        %2034 = vmatprep.subr.bf16.mxu0 0
        %2035 = vmatpush1.bf16.xpose.msra.mxu0 0
        %2036 = vmatprep.subr.bf16.mxu0 0
        %2037 = vmatpush1.bf16.xpose.msra.mxu0 0
        %2038 = vmatprep.subr.bf16.mxu0 0
        %2039 = vmatpush1.bf16.xpose.msra.mxu0 0
        %2040 = vmatprep.subr.bf16.mxu0 0
        %2041 = vmatpush1.bf16.xpose.msra.mxu0 0
        %2042 = vmatprep.subr.bf16.mxu0 0
        %2043 = vmatpush1.bf16.xpose.msra.mxu0 0
        %2044 = vmatprep.subr.bf16.mxu0 0
        %2045 = vmatpush1.bf16.xpose.msra.mxu0 0
        %2046 = vmatprep.subr.bf16.mxu0 0
        %2047 = vmatpush1.bf16.xpose.msra.mxu0 0
        %2048 = vmatprep.subr.bf16.mxu0 0
        %2049 = vmatpush1.bf16.xpose.msra.mxu0 %v2032
        %2050 = vmatprep.subr.bf16.mxu0 0
        %2051 = vmatpush2.bf16.xpose.msra.mxu0 0
        %2052 = vmatprep.subr.bf16.mxu0 0
        %2053 = vmatpush2.bf16.xpose.msra.mxu0 0
        %2054 = vmatprep.subr.bf16.mxu0 0
        %2055 = vmatpush2.bf16.xpose.msra.mxu0 0
        %2056 = vmatprep.subr.bf16.mxu0 0
        %2057 = vmatpush2.bf16.xpose.msra.mxu0 0
        %2058 = vmatprep.subr.bf16.mxu0 0
        %2059 = vmatpush2.bf16.xpose.msra.mxu0 0
        %2060 = vmatprep.subr.bf16.mxu0 0
        %2061 = vmatpush2.bf16.xpose.msra.mxu0 0
        %2062 = vmatprep.subr.bf16.mxu0 0
        %2063 = vmatpush2.bf16.xpose.msra.mxu0 0
        %2064 = vmatprep.subr.bf16.mxu0 0
        %2065 = vmatpush2.bf16.xpose.msra.mxu0 0
        %2066 = vmatprep.mubr.bf16.mxu0 0
        %2067 = vmatmul.mubr.bf16.gmra.mxu0 %v2029
        %v2068 = vpop.f32.mrf.mxu0
        %v2069 = vadd.f32 0.0, %v2068
        %v2070 = vpop.f32.mrf.mxu0
        %v2071 = vpop.f32.mrf.mxu0
        %v2072 = vadd.f32 0.0, %v2071
        %v2073 = vpop.f32.mrf.mxu0
        %2074 = vdwg.mxu0
        %v2075 = vmul.f32 %v2069, 0.25
        %v2076 = vmul.f32 %v2072, 0.25
        %v2077 = vadd.f32 %v2075, %v874
        %v2078 = vadd.f32 %v2076, %v874
        %v2079 = vsel %vm820, %v2077, -inf
        %2080 = vmax.xlane.f32.xlu0 %v2079
        %v2081 = vpop.xlane.xlu0 %2080
        %v2082 = vsel %vm820, %v2078, -inf
        %2083 = vmax.xlane.f32.xlu0 %v2082
        %v2084 = vpop.xlane.xlu0 %2083
        %v2085 = vsub.f32 %v2077, %v2081
        %v2086 = vsub.f32 %v2078, %v2084
        %v2087 = vmul.f32 %v2085, 1.442695
        %v2088 = vpow.pop %v2087
        %v2089 = vmul.f32 %v2086, 1.442695
        %v2090 = vpow.pop %v2089
        %v2091 = vsel %vm820, %v2088, 0.0
        %2092 = vadd.xlane.f32.xlu0 %v2091
        %v2093 = vpop.xlane.xlu0 %2092
        %v2094 = vsel %vm820, %v2090, 0.0
        %2095 = vadd.xlane.f32.xlu0 %v2094
        %v2096 = vpop.xlane.xlu0 %2095
        %v2097 = vrcp.pop %v2093
        %v2098 = vrcp.pop %v2096
        %v2099 = vmul.f32 %v2088, %v2097
        %v2100 = vmul.f32 %v2090, %v2098
        %v2101 = vpack.c.bf16 %v2100, %v2099
        %2103 = vrot.lane.b32.xlu0 %v1901, 112
        %v2104 = vpop.permute.xlu0 %2103
        %v2107 = vsel %vm820, %v2101, 0
        %2109 = vmatprep.subr.bf16.mxu0 0
        %2110 = vmatpush1.bf16.msra.mxu0 0
        %2111 = vmatprep.subr.bf16.mxu0 0
        %2112 = vmatpush1.bf16.msra.mxu0 0
        %2113 = vmatprep.subr.bf16.mxu0 0
        %2114 = vmatpush1.bf16.msra.mxu0 0
        %2115 = vmatprep.subr.bf16.mxu0 0
        %2116 = vmatpush1.bf16.msra.mxu0 0
        %2117 = vmatprep.subr.bf16.mxu0 0
        %2118 = vmatpush1.bf16.msra.mxu0 0
        %2119 = vmatprep.subr.bf16.mxu0 0
        %2120 = vmatpush1.bf16.msra.mxu0 0
        %2121 = vmatprep.subr.bf16.mxu0 0
        %2122 = vmatpush1.bf16.msra.mxu0 0
        %2123 = vmatprep.subr.bf16.mxu0 0
        %2124 = vmatpush1.bf16.msra.mxu0 %v2104
        %2125 = vmatprep.subr.bf16.mxu0 0
        %2126 = vmatpush2.bf16.msra.mxu0 0
        %2127 = vmatprep.subr.bf16.mxu0 0
        %2128 = vmatpush2.bf16.msra.mxu0 0
        %2129 = vmatprep.subr.bf16.mxu0 0
        %2130 = vmatpush2.bf16.msra.mxu0 0
        %2131 = vmatprep.subr.bf16.mxu0 0
        %2132 = vmatpush2.bf16.msra.mxu0 0
        %2133 = vmatprep.subr.bf16.mxu0 0
        %2134 = vmatpush2.bf16.msra.mxu0 0
        %2135 = vmatprep.subr.bf16.mxu0 0
        %2136 = vmatpush2.bf16.msra.mxu0 0
        %2137 = vmatprep.subr.bf16.mxu0 0
        %2138 = vmatpush2.bf16.msra.mxu0 0
        %2139 = vmatprep.subr.bf16.mxu0 0
        %2140 = vmatpush2.bf16.msra.mxu0 0
        %2141 = vmatprep.mubr.bf16.mxu0 0
        %2142 = vmatmul.mubr.bf16.gmra.mxu0 %v2107
        %v2143 = vpop.f32.mrf.mxu0
        %v2144 = vadd.f32 0.0, %v2143
        %v2145 = vpop.f32.mrf.mxu0
        %v2146 = vpop.f32.mrf.mxu0
        %v2147 = vadd.f32 0.0, %v2146
        %v2148 = vpop.f32.mrf.mxu0
        %2149 = vdwg.mxu0
        %2152 = vrot.lane.b32.xlu0 %v2144, 16
        %v2153 = vpop.permute.xlu0 %2152
        %2154 = vrot.lane.b32.xlu0 %v2147, 16
        %v2155 = vpop.permute.xlu0 %2154
        %2158 = vst.msk [vmem:[#allocation2 + $0x8] sm:$0xff] %vm1082, %v2153
        %2159 = vst.msk [vmem:[#allocation2 + $0x18] sm:$0xff] %vm1082, %v2155
        %2160 = vrot.lane.b32.xlu0 %v815, 96
        %v2161 = vpop.permute.xlu0 %2160
        %2162 = vrot.lane.b32.xlu0 %v1357, 32
        %v2163 = vpop.permute.xlu0 %2162
        %v2165 = vsel %vm820, %v2161, 0
        %v2168 = vsel %vm820, %v2163, 0
        %2170 = vmatprep.subr.bf16.mxu0 0
        %2171 = vmatpush1.bf16.xpose.msra.mxu0 0
        %2172 = vmatprep.subr.bf16.mxu0 0
        %2173 = vmatpush1.bf16.xpose.msra.mxu0 0
        %2174 = vmatprep.subr.bf16.mxu0 0
        %2175 = vmatpush1.bf16.xpose.msra.mxu0 0
        %2176 = vmatprep.subr.bf16.mxu0 0
        %2177 = vmatpush1.bf16.xpose.msra.mxu0 0
        %2178 = vmatprep.subr.bf16.mxu0 0
        %2179 = vmatpush1.bf16.xpose.msra.mxu0 0
        %2180 = vmatprep.subr.bf16.mxu0 0
        %2181 = vmatpush1.bf16.xpose.msra.mxu0 0
        %2182 = vmatprep.subr.bf16.mxu0 0
        %2183 = vmatpush1.bf16.xpose.msra.mxu0 0
        %2184 = vmatprep.subr.bf16.mxu0 0
        %2185 = vmatpush1.bf16.xpose.msra.mxu0 %v2168
        %2186 = vmatprep.subr.bf16.mxu0 0
        %2187 = vmatpush2.bf16.xpose.msra.mxu0 0
        %2188 = vmatprep.subr.bf16.mxu0 0
        %2189 = vmatpush2.bf16.xpose.msra.mxu0 0
        %2190 = vmatprep.subr.bf16.mxu0 0
        %2191 = vmatpush2.bf16.xpose.msra.mxu0 0
        %2192 = vmatprep.subr.bf16.mxu0 0
        %2193 = vmatpush2.bf16.xpose.msra.mxu0 0
        %2194 = vmatprep.subr.bf16.mxu0 0
        %2195 = vmatpush2.bf16.xpose.msra.mxu0 0
        %2196 = vmatprep.subr.bf16.mxu0 0
        %2197 = vmatpush2.bf16.xpose.msra.mxu0 0
        %2198 = vmatprep.subr.bf16.mxu0 0
        %2199 = vmatpush2.bf16.xpose.msra.mxu0 0
        %2200 = vmatprep.subr.bf16.mxu0 0
        %2201 = vmatpush2.bf16.xpose.msra.mxu0 0
        %2202 = vmatprep.mubr.bf16.mxu0 0
        %2203 = vmatmul.mubr.bf16.gmra.mxu0 %v2165
        %v2204 = vpop.f32.mrf.mxu0
        %v2205 = vadd.f32 0.0, %v2204
        %v2206 = vpop.f32.mrf.mxu0
        %v2207 = vpop.f32.mrf.mxu0
        %v2208 = vadd.f32 0.0, %v2207
        %v2209 = vpop.f32.mrf.mxu0
        %2210 = vdwg.mxu0
        %v2211 = vmul.f32 %v2205, 0.25
        %v2212 = vmul.f32 %v2208, 0.25
        %v2213 = vadd.f32 %v2211, %v874
        %v2214 = vadd.f32 %v2212, %v874
        %v2215 = vsel %vm820, %v2213, -inf
        %2216 = vmax.xlane.f32.xlu0 %v2215
        %v2217 = vpop.xlane.xlu0 %2216
        %v2218 = vsel %vm820, %v2214, -inf
        %2219 = vmax.xlane.f32.xlu0 %v2218
        %v2220 = vpop.xlane.xlu0 %2219
        %v2221 = vsub.f32 %v2213, %v2217
        %v2222 = vsub.f32 %v2214, %v2220
        %v2223 = vmul.f32 %v2221, 1.442695
        %v2224 = vpow.pop %v2223
        %v2225 = vmul.f32 %v2222, 1.442695
        %v2226 = vpow.pop %v2225
        %v2227 = vsel %vm820, %v2224, 0.0
        %2228 = vadd.xlane.f32.xlu0 %v2227
        %v2229 = vpop.xlane.xlu0 %2228
        %v2230 = vsel %vm820, %v2226, 0.0
        %2231 = vadd.xlane.f32.xlu0 %v2230
        %v2232 = vpop.xlane.xlu0 %2231
        %v2233 = vrcp.pop %v2229
        %v2234 = vrcp.pop %v2232
        %v2235 = vmul.f32 %v2224, %v2233
        %v2236 = vmul.f32 %v2226, %v2234
        %v2237 = vpack.c.bf16 %v2236, %v2235
        %2238 = vrot.lane.b32.xlu0 %v1901, 96
        %v2239 = vpop.permute.xlu0 %2238
        %v2242 = vsel %vm820, %v2237, 0
        %2244 = vmatprep.subr.bf16.mxu0 0
        %2245 = vmatpush1.bf16.msra.mxu0 0
        %2246 = vmatprep.subr.bf16.mxu0 0
        %2247 = vmatpush1.bf16.msra.mxu0 0
        %2248 = vmatprep.subr.bf16.mxu0 0
        %2249 = vmatpush1.bf16.msra.mxu0 0
        %2250 = vmatprep.subr.bf16.mxu0 0
        %2251 = vmatpush1.bf16.msra.mxu0 0
        %2252 = vmatprep.subr.bf16.mxu0 0
        %2253 = vmatpush1.bf16.msra.mxu0 0
        %2254 = vmatprep.subr.bf16.mxu0 0
        %2255 = vmatpush1.bf16.msra.mxu0 0
        %2256 = vmatprep.subr.bf16.mxu0 0
        %2257 = vmatpush1.bf16.msra.mxu0 0
        %2258 = vmatprep.subr.bf16.mxu0 0
        %2259 = vmatpush1.bf16.msra.mxu0 %v2239
        %2260 = vmatprep.subr.bf16.mxu0 0
        %2261 = vmatpush2.bf16.msra.mxu0 0
        %2262 = vmatprep.subr.bf16.mxu0 0
        %2263 = vmatpush2.bf16.msra.mxu0 0
        %2264 = vmatprep.subr.bf16.mxu0 0
        %2265 = vmatpush2.bf16.msra.mxu0 0
        %2266 = vmatprep.subr.bf16.mxu0 0
        %2267 = vmatpush2.bf16.msra.mxu0 0
        %2268 = vmatprep.subr.bf16.mxu0 0
        %2269 = vmatpush2.bf16.msra.mxu0 0
        %2270 = vmatprep.subr.bf16.mxu0 0
        %2271 = vmatpush2.bf16.msra.mxu0 0
        %2272 = vmatprep.subr.bf16.mxu0 0
        %2273 = vmatpush2.bf16.msra.mxu0 0
        %2274 = vmatprep.subr.bf16.mxu0 0
        %2275 = vmatpush2.bf16.msra.mxu0 0
        %2276 = vmatprep.mubr.bf16.mxu0 0
        %2277 = vmatmul.mubr.bf16.gmra.mxu0 %v2242
        %v2278 = vpop.f32.mrf.mxu0
        %v2279 = vadd.f32 0.0, %v2278
        %v2280 = vpop.f32.mrf.mxu0
        %v2281 = vpop.f32.mrf.mxu0
        %v2282 = vadd.f32 0.0, %v2281
        %v2283 = vpop.f32.mrf.mxu0
        %2284 = vdwg.mxu0
        %2287 = vrot.lane.b32.xlu0 %v2279, 32
        %v2288 = vpop.permute.xlu0 %2287
        %2289 = vrot.lane.b32.xlu0 %v2282, 32
        %v2290 = vpop.permute.xlu0 %2289
        %2293 = vst.msk [vmem:[#allocation2 + $0x8] sm:$0xff] %vm1218, %v2288
        %2294 = vst.msk [vmem:[#allocation2 + $0x18] sm:$0xff] %vm1218, %v2290
        %2295 = vrot.lane.b32.xlu0 %v815, 80
        %v2296 = vpop.permute.xlu0 %2295
        %2297 = vrot.lane.b32.xlu0 %v1357, 16
        %v2298 = vpop.permute.xlu0 %2297
        %v2300 = vsel %vm820, %v2296, 0
        %v2303 = vsel %vm820, %v2298, 0
        %2305 = vmatprep.subr.bf16.mxu0 0
        %2306 = vmatpush1.bf16.xpose.msra.mxu0 0
        %2307 = vmatprep.subr.bf16.mxu0 0
        %2308 = vmatpush1.bf16.xpose.msra.mxu0 0
        %2309 = vmatprep.subr.bf16.mxu0 0
        %2310 = vmatpush1.bf16.xpose.msra.mxu0 0
        %2311 = vmatprep.subr.bf16.mxu0 0
        %2312 = vmatpush1.bf16.xpose.msra.mxu0 0
        %2313 = vmatprep.subr.bf16.mxu0 0
        %2314 = vmatpush1.bf16.xpose.msra.mxu0 0
        %2315 = vmatprep.subr.bf16.mxu0 0
        %2316 = vmatpush1.bf16.xpose.msra.mxu0 0
        %2317 = vmatprep.subr.bf16.mxu0 0
        %2318 = vmatpush1.bf16.xpose.msra.mxu0 0
        %2319 = vmatprep.subr.bf16.mxu0 0
        %2320 = vmatpush1.bf16.xpose.msra.mxu0 %v2303
        %2321 = vmatprep.subr.bf16.mxu0 0
        %2322 = vmatpush2.bf16.xpose.msra.mxu0 0
        %2323 = vmatprep.subr.bf16.mxu0 0
        %2324 = vmatpush2.bf16.xpose.msra.mxu0 0
        %2325 = vmatprep.subr.bf16.mxu0 0
        %2326 = vmatpush2.bf16.xpose.msra.mxu0 0
        %2327 = vmatprep.subr.bf16.mxu0 0
        %2328 = vmatpush2.bf16.xpose.msra.mxu0 0
        %2329 = vmatprep.subr.bf16.mxu0 0
        %2330 = vmatpush2.bf16.xpose.msra.mxu0 0
        %2331 = vmatprep.subr.bf16.mxu0 0
        %2332 = vmatpush2.bf16.xpose.msra.mxu0 0
        %2333 = vmatprep.subr.bf16.mxu0 0
        %2334 = vmatpush2.bf16.xpose.msra.mxu0 0
        %2335 = vmatprep.subr.bf16.mxu0 0
        %2336 = vmatpush2.bf16.xpose.msra.mxu0 0
        %2337 = vmatprep.mubr.bf16.mxu0 0
        %2338 = vmatmul.mubr.bf16.gmra.mxu0 %v2300
        %v2339 = vpop.f32.mrf.mxu0
        %v2340 = vadd.f32 0.0, %v2339
        %v2341 = vpop.f32.mrf.mxu0
        %v2342 = vpop.f32.mrf.mxu0
        %v2343 = vadd.f32 0.0, %v2342
        %v2344 = vpop.f32.mrf.mxu0
        %2345 = vdwg.mxu0
        %v2346 = vmul.f32 %v2340, 0.25
        %v2347 = vmul.f32 %v2343, 0.25
        %v2348 = vadd.f32 %v2346, %v874
        %v2349 = vadd.f32 %v2347, %v874
        %v2350 = vsel %vm820, %v2348, -inf
        %2351 = vmax.xlane.f32.xlu0 %v2350
        %v2352 = vpop.xlane.xlu0 %2351
        %v2353 = vsel %vm820, %v2349, -inf
        %2354 = vmax.xlane.f32.xlu0 %v2353
        %v2355 = vpop.xlane.xlu0 %2354
        %v2356 = vsub.f32 %v2348, %v2352
        %v2357 = vsub.f32 %v2349, %v2355
        %v2358 = vmul.f32 %v2356, 1.442695
        %v2359 = vpow.pop %v2358
        %v2360 = vmul.f32 %v2357, 1.442695
        %v2361 = vpow.pop %v2360
        %v2362 = vsel %vm820, %v2359, 0.0
        %2363 = vadd.xlane.f32.xlu0 %v2362
        %v2364 = vpop.xlane.xlu0 %2363
        %v2365 = vsel %vm820, %v2361, 0.0
        %2366 = vadd.xlane.f32.xlu0 %v2365
        %v2367 = vpop.xlane.xlu0 %2366
        %v2368 = vrcp.pop %v2364
        %v2369 = vrcp.pop %v2367
        %v2370 = vmul.f32 %v2359, %v2368
        %v2371 = vmul.f32 %v2361, %v2369
        %v2372 = vpack.c.bf16 %v2371, %v2370
        %2373 = vrot.lane.b32.xlu0 %v1901, 80
        %v2374 = vpop.permute.xlu0 %2373
        %v2377 = vsel %vm820, %v2372, 0
        %2379 = vmatprep.subr.bf16.mxu0 0
        %2380 = vmatpush1.bf16.msra.mxu0 0
        %2381 = vmatprep.subr.bf16.mxu0 0
        %2382 = vmatpush1.bf16.msra.mxu0 0
        %2383 = vmatprep.subr.bf16.mxu0 0
        %2384 = vmatpush1.bf16.msra.mxu0 0
        %2385 = vmatprep.subr.bf16.mxu0 0
        %2386 = vmatpush1.bf16.msra.mxu0 0
        %2387 = vmatprep.subr.bf16.mxu0 0
        %2388 = vmatpush1.bf16.msra.mxu0 0
        %2389 = vmatprep.subr.bf16.mxu0 0
        %2390 = vmatpush1.bf16.msra.mxu0 0
        %2391 = vmatprep.subr.bf16.mxu0 0
        %2392 = vmatpush1.bf16.msra.mxu0 0
        %2393 = vmatprep.subr.bf16.mxu0 0
        %2394 = vmatpush1.bf16.msra.mxu0 %v2374
        %2395 = vmatprep.subr.bf16.mxu0 0
        %2396 = vmatpush2.bf16.msra.mxu0 0
        %2397 = vmatprep.subr.bf16.mxu0 0
        %2398 = vmatpush2.bf16.msra.mxu0 0
        %2399 = vmatprep.subr.bf16.mxu0 0
        %2400 = vmatpush2.bf16.msra.mxu0 0
        %2401 = vmatprep.subr.bf16.mxu0 0
        %2402 = vmatpush2.bf16.msra.mxu0 0
        %2403 = vmatprep.subr.bf16.mxu0 0
        %2404 = vmatpush2.bf16.msra.mxu0 0
        %2405 = vmatprep.subr.bf16.mxu0 0
        %2406 = vmatpush2.bf16.msra.mxu0 0
        %2407 = vmatprep.subr.bf16.mxu0 0
        %2408 = vmatpush2.bf16.msra.mxu0 0
        %2409 = vmatprep.subr.bf16.mxu0 0
        %2410 = vmatpush2.bf16.msra.mxu0 0
        %2411 = vmatprep.mubr.bf16.mxu0 0
        %2412 = vmatmul.mubr.bf16.gmra.mxu0 %v2377
        %v2413 = vpop.f32.mrf.mxu0
        %v2414 = vadd.f32 0.0, %v2413
        %v2415 = vpop.f32.mrf.mxu0
        %v2416 = vpop.f32.mrf.mxu0
        %v2417 = vadd.f32 0.0, %v2416
        %v2418 = vpop.f32.mrf.mxu0
        %2419 = vdwg.mxu0
        %2422 = vrot.lane.b32.xlu0 %v2414, 48
        %v2423 = vpop.permute.xlu0 %2422
        %2424 = vrot.lane.b32.xlu0 %v2417, 48
        %v2425 = vpop.permute.xlu0 %2424
        %2428 = vst.msk [vmem:[#allocation2 + $0x8] sm:$0xff] %vm1354, %v2423
        %2429 = vst.msk [vmem:[#allocation2 + $0x18] sm:$0xff] %vm1354, %v2425
        %v2430 = vld [vmem:[#allocation2] sm:$0xff]
        %v2431 = vld [vmem:[#allocation2 + $0x8] sm:$0xff]
        %v2432 = vld [vmem:[#allocation2 + $0x10] sm:$0xff]
        %v2433 = vld [vmem:[#allocation2 + $0x18] sm:$0xff]
        %2434 = vst [vmem:[%s263] sm:$0xff] %v2430
        %2435 = vst.msk [vmem:[%s263 + $0x8] sm:$0xff] %vm682, %v2431
        %2436 = vst [vmem:[%s263 + $0x10] sm:$0xff] %v2432
        %2437 = vst.msk [vmem:[%s263 + $0x18] sm:$0xff] %vm682, %v2433
        %s2438 = sand.u32 %s126, 1
        %s2439 = scalar_lea.sflag [#allocation5], %s2438
        %s2440 = sand.u32 %s126, 1
        %s2441 = smul.addr %s2440, 32
        %s2442 = scalar_lea.vmem [#allocation9], %s2441
        // Predicated region
        $region49: #{tpu_custom_call.1} parent=35 // pred_check
          %p2443 = pneg %p136
        $region50: #{tpu_custom_call.1} parent=35 // pred_check_branch
          %2445 = sbr.rel (%p2443) target = $region52
        $region51: #{tpu_custom_call.1} parent=35 // pred_region
          %s2447 = ssub.s32 512, 512
          %2448 = vsyncadd %s2439, %s2447
          %s2449 = smul.addr %s24, 4
          %s2450 = smul.addr %s2449, 128
          %s2451 = scalar_lea.hbm %s4, %s2450
          %s2452 = sshll.u32 %s2442, 4
          %s2453 = int_to_ptr.vmem [resolvable:$true] %s2452
          %2458 = dma.vmem_to_hbm [thread:$0]  %s2453, 512, %s2451, %s2439, 256, 256, 16
        $region52: #{tpu_custom_call.1} parent=35 // pred_fallthru
          _
      $region36: #{tpu_custom_call.1} parent=5 // pred_fallthru
        _
      %p2459 = scmp.le.s32.totalorder 2, %s19
      // Predicated region
      $region53: #{tpu_custom_call.1} parent=5 // pred_check
        %p2460 = pneg %p2459
      $region54: #{tpu_custom_call.1} parent=5 // pred_check_branch
        %2462 = sbr.rel (%p2460) target = $region56
      $region55: #{tpu_custom_call.1} parent=5 // pred_region
        %s2463 = ssub.s32 %s19, 2
        // Predicated region
        $region57: #{tpu_custom_call.1} parent=55 // pred_check
          %p2464 = pneg %p142
        $region58: #{tpu_custom_call.1} parent=55 // pred_check_branch
          %2466 = sbr.rel (%p2464) target = $region60
        $region59: #{tpu_custom_call.1} parent=55 // pred_region
          %s2467 = sand.u32 %s127, 1
          %s2468 = scalar_lea.sflag [#allocation5], %s2467
          %s2469 = sand.u32 %s127, 1
          %s2470 = smul.addr %s2469, 32
          %s2471 = scalar_lea.vmem [#allocation9], %s2470
          %2472 = dma.done %s2468, 512
        $region60: #{tpu_custom_call.1} parent=55 // pred_fallthru
          _
      $region56: #{tpu_custom_call.1} parent=5 // pred_fallthru
        _
    $region6: #{tpu_custom_call.1} parent=1 // loop_footer
      %s23 = sadd.s32 1, %s19
    $region7: #{tpu_custom_call.1} parent=1 // loop_footer_branch
      %18 = sbr.rel target = $region3
    $region8: #{tpu_custom_call.1} parent=1 // loop_exit
      _
    %2473 = vsyncpa [#allocation4], 1
    %s2474 = scalar_lea.sflag [#allocation4], 1
    %2475 = vsyncpa %s2474, 1
    %2476 = vsyncpa [#allocation7], 1
    %s2477 = scalar_lea.sflag [#allocation7], 1
    %2478 = vsyncpa %s2477, 1
    %2479 = vsyncpa [#allocation5], 1
    %s2480 = scalar_lea.sflag [#allocation5], 1
    %2481 = vsyncpa %s2480, 1

</llo_original>
